<compile_context>
chip_gen: v7x
topology: tpu7x:2x2x1
jax: 0.10.0
libtpu: 0.0.40
codegen_flags: <defaults>
</compile_context>

<pallas_src>
import numpy as np

import jax
import jax.numpy as jnp
from jax.experimental import pallas as pl
from jax.experimental.pallas import tpu as pltpu

EPS = 1e-5


# --------------------------------------------------------------------------- #
# Kernel                                                                      #
# --------------------------------------------------------------------------- #
def make_resblock_kernel(N, H, W, C):
    LANES = N * W * C
    S = 2 * C - 1            # max |lane shift| = C*|dx| + |ci - co|
    NSHIFT = 2 * S + 1
    inv_denom = 1.0 / float(N * H * W)

    groups = LANES // C
    assert groups & (groups - 1) == 0, "N*W must be a power of two (lane all-reduce)"

    def lane_allreduce_mod_c(v):
        # all-reduce across lanes within residue classes mod C (stride-C butterfly)
        sh = C
        while sh < LANES:
            v = v + pltpu.roll(v, sh, 1)
            sh *= 2
        return v

    def conv3x3(xpad, wp):
        # xpad: (H+2, LANES) H-zero-padded slab; wp: (NSHIFT*3, LANES) weight planes
        acc = jnp.zeros((H, LANES), jnp.float32)
        for si in range(NSHIFT):
            s = si - S
            rolled = xpad if s == 0 else pltpu.roll(xpad, (-s) % LANES, 1)
            for dy in range(3):
                wrow = wp[si * 3 + dy:si * 3 + dy + 1, :]         # (1, LANES)
                acc = acc + rolled[dy:dy + H, :] * wrow
        return acc

    def bn(y, g, be):
        # single-pass batch stats, fused scale/shift
        rsum = lane_allreduce_mod_c(jnp.sum(y, axis=0, keepdims=True))
        rsq = lane_allreduce_mod_c(jnp.sum(y * y, axis=0, keepdims=True))
        mu = rsum * inv_denom
        var = rsq * inv_denom - mu * mu
        scale = g * jax.lax.rsqrt(var + EPS)
        shift = be - mu * scale
        return y * scale + shift

    def kernel(x_ref, wp1_ref, wp2_ref, cp_ref, out_ref, pad_ref):
        x = x_ref[...]                                            # (H, LANES)

        # zero only the 1-row H-pad border once; interior is fully overwritten
        zrow = jnp.zeros((1, LANES), jnp.float32)
        pad_ref[0:1, :] = zrow
        pad_ref[H + 1:H + 2, :] = zrow

        b1, g1, be1 = cp_ref[0:1, :], cp_ref[1:2, :], cp_ref[2:3, :]
        b2, g2, be2 = cp_ref[3:4, :], cp_ref[4:5, :], cp_ref[5:6, :]
        a = cp_ref[6:7, :]

        wp1 = wp1_ref[...]
        wp2 = wp2_ref[...]

        # conv_1 -> bn_1 -> PReLU
        pad_ref[1:H + 1, :] = x
        y = conv3x3(pad_ref[...], wp1) + b1
        y = bn(y, g1, be1)
        y = jnp.maximum(y, 0.0) + a * jnp.minimum(y, 0.0)

        # conv_2 -> bn_2 -> residual add
        pad_ref[1:H + 1, :] = y
        y2 = conv3x3(pad_ref[...], wp2) + b2
        y2 = bn(y2, g2, be2)
        out_ref[...] = y2 + x

    return kernel


# --------------------------------------------------------------------------- #
# Host-side parameter packing (done once, outside the hot path)               #
# --------------------------------------------------------------------------- #
def pack_conv_weight_planes(w_hwio, N, W, C):
    """(3,3,Cin,Cout) conv weight -> (NSHIFT*3, N*W*C) per-lane weight planes.

    For lane L = n*W*C + w*C + co and lane-shift s, the source lane L+s holds the
    input value at (n, w+dx, ci) with  dx*C + ci = s + co.  The plane entry is
    w[dy, dx+1, ci, co] if that tap is valid (dx in {-1,0,1} and 0<=w+dx<W), else 0
    -- which also zeroes cross-image / wrapped lanes.
    """
    w = np.asarray(w_hwio, np.float32)
    LANES = N * W * C
    S = 2 * C - 1
    planes = np.zeros((2 * S + 1, 3, LANES), np.float32)
    for si in range(2 * S + 1):
        s = si - S
        for lane in range(LANES):
            co = lane % C
            wpos = (lane // C) % W
            t = s + co                       # = dx*C + ci
            dx, ci = t // C, t % C           # Python floor semantics
            if dx < -1 or dx > 1:
                continue
            if not (0 <= wpos + dx < W):
                continue
            for dy in range(3):
                planes[si, dy, lane] = w[dy, dx + 1, ci, co]
    return jnp.asarray(planes.reshape((2 * S + 1) * 3, LANES))


def pack_channel_params(params, N, W, C):
    """bias/gamma/beta/PReLU-a -> one (8, N*W*C) lane-dense plane."""
    LANES = N * W * C
    lane_c = np.arange(LANES) % C

    def lanevec(v):
        v = np.asarray(v, np.float32).reshape(-1)
        if v.size == 1:
            return np.full((LANES,), float(v[0]), np.float32)
        return v[lane_c]

    rows = [lanevec(params["b1"]), lanevec(params["g1"]), lanevec(params["be1"]),
            lanevec(params["b2"]), lanevec(params["g2"]), lanevec(params["be2"]),
            lanevec(params["a"]), np.zeros((LANES,), np.float32)]
    return jnp.asarray(np.stack(rows, axis=0))                    # (8, LANES)


def pack_params(params, N, H, W, C):
    return {
        "wp1": pack_conv_weight_planes(params["w1"], N, W, C),
        "wp2": pack_conv_weight_planes(params["w2"], N, W, C),
        "cp": pack_channel_params(params, N, W, C),
    }


# --------------------------------------------------------------------------- #
# Forward wrapper                                                             #
# --------------------------------------------------------------------------- #
def resblock_forward(x_nchw, packed):
    """x_nchw: (N, C, H, W) float32 -> (N, C, H, W) float32."""
    N, C, H, W = x_nchw.shape
    LANES = N * W * C

    # NCHW -> (H, N, W, C) -> lane-dense (H, N*W*C) slab (layout plumbing only)
    x2d = jnp.transpose(x_nchw, (2, 0, 3, 1)).reshape(H, LANES).astype(jnp.float32)

    kernel = make_resblock_kernel(N, H, W, C)
    vmem = pl.BlockSpec(memory_space=pltpu.MemorySpace.VMEM)

    # TODO(synk): on v7x, an H/N-tiled "parallel" grid across the two TensorCores
    # would need a two-pass BN (cross-core stat reduction); not worth it at this size.
    out2d = pl.pallas_call(
        kernel,
        out_shape=jax.ShapeDtypeStruct((H, LANES), jnp.float32),
        in_specs=[vmem, vmem, vmem, vmem],
        out_specs=vmem,
        scratch_shapes=[pltpu.VMEM((H + 2, LANES), jnp.float32)],
    )(x2d, packed["wp1"], packed["wp2"], packed["cp"])

    # (H, N*W*C) -> (H, N, W, C) -> NCHW
    return jnp.transpose(out2d.reshape(H, N, W, C), (1, 3, 0, 2))


# --------------------------------------------------------------------------- #
# Params + pure-JAX reference (matches the PyTorch forward, NCHW)             #
# --------------------------------------------------------------------------- #
def init_params(key, C):
    k1, k2, k3, k4 = jax.random.split(key, 4)
    bound = 1.0 / (3.0 * 3.0 * C) ** 0.5
    return {
        "w1": jax.random.uniform(k1, (3, 3, C, C), jnp.float32, -bound, bound),
        "b1": jax.random.uniform(k2, (C,), jnp.float32, -bound, bound),
        "g1": jnp.ones((C,), jnp.float32),
        "be1": jnp.zeros((C,), jnp.float32),
        "a": jnp.full((1,), 0.25, jnp.float32),     # PyTorch PReLU default
        "w2": jax.random.uniform(k3, (3, 3, C, C), jnp.float32, -bound, bound),
        "b2": jax.random.uniform(k4, (C,), jnp.float32, -bound, bound),
        "g2": jnp.ones((C,), jnp.float32),
        "be2": jnp.zeros((C,), jnp.float32),
    }


def resblock_reference(x, p):
    C = x.shape[1]

    def conv(z, w_hwio, b):
        w = jnp.transpose(w_hwio, (3, 2, 0, 1))                   # OIHW
        y = jax.lax.conv_general_dilated(
            z, w, (1, 1), "SAME",
            dimension_numbers=("NCHW", "OIHW", "NCHW"),
            precision=jax.lax.Precision.HIGHEST)
        return y + b.reshape(1, C, 1, 1)

    def bn(y, g, b):
        mu = jnp.mean(y, axis=(0, 2, 3), keepdims=True)
        var = jnp.mean((y - mu) ** 2, axis=(0, 2, 3), keepdims=True)
        return (y - mu) / jnp.sqrt(var + EPS) * g.reshape(1, C, 1, 1) \
            + b.reshape(1, C, 1, 1)

    out = conv(x, p["w1"], p["b1"])
    out = bn(out, p["g1"], p["be1"])
    a = p["a"].reshape(())
    out = jnp.where(out >= 0, out, a * out)
    out = conv(out, p["w2"], p["b2"])
    out = bn(out, p["g2"], p["be2"])
    return out + x


if __name__ == "__main__":
    key = jax.random.PRNGKey(0)
    kx, kp = jax.random.split(key)
    N, C, H, W = 2, 4, 16, 16
    x = jax.random.normal(kx, (N, C, H, W), jnp.float32)
    params = init_params(kp, C)
    packed = pack_params(params, N, H, W, C)

    fwd = jax.jit(resblock_forward)
    out = jax.block_until_ready(fwd(x, packed))
    ref = jax.block_until_ready(resblock_reference(x, params))

    assert out.shape == (N, C, H, W), out.shape
    err = float(jnp.max(jnp.abs(out - ref)))
    assert jnp.allclose(out, ref, atol=1e-3, rtol=1e-3), err
    print("KERNEL_OK")
</pallas_src>

<mosaic_0001>
module attributes {stable_mosaic.version = 11 : i64} {
  func.func @kernel(%arg0: memref<16x128xf32, #tpu.memory_space<vmem>>, %arg1: memref<45x128xf32, #tpu.memory_space<vmem>>, %arg2: memref<45x128xf32, #tpu.memory_space<vmem>>, %arg3: memref<8x128xf32, #tpu.memory_space<vmem>>, %arg4: memref<16x128xf32, #tpu.memory_space<vmem>>, %arg5: memref<18x128xf32, #tpu.memory_space<vmem>>) attributes {dimension_semantics = [], scalar_prefetch = 0 : i64, scratch_operands = 1 : i64, tpu.core_type = #tpu.core_type<tc>} {
    %c0 = arith.constant 0 : index
    %c0_0 = arith.constant 0 : index
    %0 = vector.load %arg0[%c0, %c0_0] : memref<16x128xf32, #tpu.memory_space<vmem>>, vector<16x128xf32>
    %cst = arith.constant 0.000000e+00 : f32
    %1 = vector.broadcast %cst : f32 to vector<1x128xf32>
    %c0_1 = arith.constant 0 : index
    %c0_2 = arith.constant 0 : index
    %2 = vector.load %arg5[%c0_1, %c0_2] : memref<18x128xf32, #tpu.memory_space<vmem>>, vector<1x128xf32>
    tpu.vector_store %arg5[%c0_1, %c0_2], %1 {strides = array<i32>} : memref<18x128xf32, #tpu.memory_space<vmem>>, vector<1x128xf32>,
    %c17 = arith.constant 17 : index
    %c0_3 = arith.constant 0 : index
    %3 = vector.load %arg5[%c17, %c0_3] : memref<18x128xf32, #tpu.memory_space<vmem>>, vector<1x128xf32>
    tpu.vector_store %arg5[%c17, %c0_3], %1 {strides = array<i32>} : memref<18x128xf32, #tpu.memory_space<vmem>>, vector<1x128xf32>,
    %c0_4 = arith.constant 0 : index
    %c0_5 = arith.constant 0 : index
    %4 = vector.load %arg3[%c0_4, %c0_5] : memref<8x128xf32, #tpu.memory_space<vmem>>, vector<1x128xf32>
    %c1 = arith.constant 1 : index
    %c0_6 = arith.constant 0 : index
    %5 = vector.load %arg3[%c1, %c0_6] : memref<8x128xf32, #tpu.memory_space<vmem>>, vector<1x128xf32>
    %c2 = arith.constant 2 : index
    %c0_7 = arith.constant 0 : index
    %6 = vector.load %arg3[%c2, %c0_7] : memref<8x128xf32, #tpu.memory_space<vmem>>, vector<1x128xf32>
    %c3 = arith.constant 3 : index
    %c0_8 = arith.constant 0 : index
    %7 = vector.load %arg3[%c3, %c0_8] : memref<8x128xf32, #tpu.memory_space<vmem>>, vector<1x128xf32>
    %c4 = arith.constant 4 : index
    %c0_9 = arith.constant 0 : index
    %8 = vector.load %arg3[%c4, %c0_9] : memref<8x128xf32, #tpu.memory_space<vmem>>, vector<1x128xf32>
    %c5 = arith.constant 5 : index
    %c0_10 = arith.constant 0 : index
    %9 = vector.load %arg3[%c5, %c0_10] : memref<8x128xf32, #tpu.memory_space<vmem>>, vector<1x128xf32>
    %c6 = arith.constant 6 : index
    %c0_11 = arith.constant 0 : index
    %10 = vector.load %arg3[%c6, %c0_11] : memref<8x128xf32, #tpu.memory_space<vmem>>, vector<1x128xf32>
    %c0_12 = arith.constant 0 : index
    %c0_13 = arith.constant 0 : index
    %11 = vector.load %arg1[%c0_12, %c0_13] : memref<45x128xf32, #tpu.memory_space<vmem>>, vector<45x128xf32>
    %c0_14 = arith.constant 0 : index
    %c0_15 = arith.constant 0 : index
    %12 = vector.load %arg2[%c0_14, %c0_15] : memref<45x128xf32, #tpu.memory_space<vmem>>, vector<45x128xf32>
    %c1_16 = arith.constant 1 : index
    %c0_17 = arith.constant 0 : index
    %13 = vector.load %arg5[%c1_16, %c0_17] : memref<18x128xf32, #tpu.memory_space<vmem>>, vector<16x128xf32>
    tpu.vector_store %arg5[%c1_16, %c0_17], %0 {strides = array<i32>} : memref<18x128xf32, #tpu.memory_space<vmem>>, vector<16x128xf32>,
    %c0_18 = arith.constant 0 : index
    %c0_19 = arith.constant 0 : index
    %14 = vector.load %arg5[%c0_18, %c0_19] : memref<18x128xf32, #tpu.memory_space<vmem>>, vector<18x128xf32>
    %cst_20 = arith.constant 0.000000e+00 : f32
    %15 = vector.broadcast %cst_20 : f32 to vector<16x128xf32>
    %c7_i32 = arith.constant 7 : i32
    %16 = tpu.dynamic_rotate %14 by %c7_i32 dim 1 : vector<18x128xf32>, i32 -> vector<18x128xf32>
    %17 = vector.extract_strided_slice %11 {offsets = [0, 0], sizes = [1, 128], strides = [1, 1]} : vector<45x128xf32> to vector<1x128xf32>
    %18 = vector.extract_strided_slice %16 {offsets = [0, 0], sizes = [16, 128], strides = [1, 1]} : vector<18x128xf32> to vector<16x128xf32>
    %19 = vector.broadcast %17 : vector<1x128xf32> to vector<16x128xf32>
    %20 = arith.mulf %18, %19 : vector<16x128xf32>
    %21 = arith.addf %15, %20 : vector<16x128xf32>
    %22 = vector.extract_strided_slice %11 {offsets = [1, 0], sizes = [1, 128], strides = [1, 1]} : vector<45x128xf32> to vector<1x128xf32>
    %23 = vector.extract_strided_slice %16 {offsets = [1, 0], sizes = [16, 128], strides = [1, 1]} : vector<18x128xf32> to vector<16x128xf32>
    %24 = vector.broadcast %22 : vector<1x128xf32> to vector<16x128xf32>
    %25 = arith.mulf %23, %24 : vector<16x128xf32>
    %26 = arith.addf %21, %25 : vector<16x128xf32>
    %27 = vector.extract_strided_slice %11 {offsets = [2, 0], sizes = [1, 128], strides = [1, 1]} : vector<45x128xf32> to vector<1x128xf32>
    %28 = vector.extract_strided_slice %16 {offsets = [2, 0], sizes = [16, 128], strides = [1, 1]} : vector<18x128xf32> to vector<16x128xf32>
    %29 = vector.broadcast %27 : vector<1x128xf32> to vector<16x128xf32>
    %30 = arith.mulf %28, %29 : vector<16x128xf32>
    %31 = arith.addf %26, %30 : vector<16x128xf32>
    %c6_i32 = arith.constant 6 : i32
    %32 = tpu.dynamic_rotate %14 by %c6_i32 dim 1 : vector<18x128xf32>, i32 -> vector<18x128xf32>
    %33 = vector.extract_strided_slice %11 {offsets = [3, 0], sizes = [1, 128], strides = [1, 1]} : vector<45x128xf32> to vector<1x128xf32>
    %34 = vector.extract_strided_slice %32 {offsets = [0, 0], sizes = [16, 128], strides = [1, 1]} : vector<18x128xf32> to vector<16x128xf32>
    %35 = vector.broadcast %33 : vector<1x128xf32> to vector<16x128xf32>
    %36 = arith.mulf %34, %35 : vector<16x128xf32>
    %37 = arith.addf %31, %36 : vector<16x128xf32>
    %38 = vector.extract_strided_slice %11 {offsets = [4, 0], sizes = [1, 128], strides = [1, 1]} : vector<45x128xf32> to vector<1x128xf32>
    %39 = vector.extract_strided_slice %32 {offsets = [1, 0], sizes = [16, 128], strides = [1, 1]} : vector<18x128xf32> to vector<16x128xf32>
    %40 = vector.broadcast %38 : vector<1x128xf32> to vector<16x128xf32>
    %41 = arith.mulf %39, %40 : vector<16x128xf32>
    %42 = arith.addf %37, %41 : vector<16x128xf32>
    %43 = vector.extract_strided_slice %11 {offsets = [5, 0], sizes = [1, 128], strides = [1, 1]} : vector<45x128xf32> to vector<1x128xf32>
    %44 = vector.extract_strided_slice %32 {offsets = [2, 0], sizes = [16, 128], strides = [1, 1]} : vector<18x128xf32> to vector<16x128xf32>
    %45 = vector.broadcast %43 : vector<1x128xf32> to vector<16x128xf32>
    %46 = arith.mulf %44, %45 : vector<16x128xf32>
    %47 = arith.addf %42, %46 : vector<16x128xf32>
    %c5_i32 = arith.constant 5 : i32
    %48 = tpu.dynamic_rotate %14 by %c5_i32 dim 1 : vector<18x128xf32>, i32 -> vector<18x128xf32>
    %49 = vector.extract_strided_slice %11 {offsets = [6, 0], sizes = [1, 128], strides = [1, 1]} : vector<45x128xf32> to vector<1x128xf32>
    %50 = vector.extract_strided_slice %48 {offsets = [0, 0], sizes = [16, 128], strides = [1, 1]} : vector<18x128xf32> to vector<16x128xf32>
    %51 = vector.broadcast %49 : vector<1x128xf32> to vector<16x128xf32>
    %52 = arith.mulf %50, %51 : vector<16x128xf32>
    %53 = arith.addf %47, %52 : vector<16x128xf32>
    %54 = vector.extract_strided_slice %11 {offsets = [7, 0], sizes = [1, 128], strides = [1, 1]} : vector<45x128xf32> to vector<1x128xf32>
    %55 = vector.extract_strided_slice %48 {offsets = [1, 0], sizes = [16, 128], strides = [1, 1]} : vector<18x128xf32> to vector<16x128xf32>
    %56 = vector.broadcast %54 : vector<1x128xf32> to vector<16x128xf32>
    %57 = arith.mulf %55, %56 : vector<16x128xf32>
    %58 = arith.addf %53, %57 : vector<16x128xf32>
    %59 = vector.extract_strided_slice %11 {offsets = [8, 0], sizes = [1, 128], strides = [1, 1]} : vector<45x128xf32> to vector<1x128xf32>
    %60 = vector.extract_strided_slice %48 {offsets = [2, 0], sizes = [16, 128], strides = [1, 1]} : vector<18x128xf32> to vector<16x128xf32>
    %61 = vector.broadcast %59 : vector<1x128xf32> to vector<16x128xf32>
    %62 = arith.mulf %60, %61 : vector<16x128xf32>
    %63 = arith.addf %58, %62 : vector<16x128xf32>
    %c4_i32 = arith.constant 4 : i32
    %64 = tpu.dynamic_rotate %14 by %c4_i32 dim 1 : vector<18x128xf32>, i32 -> vector<18x128xf32>
    %65 = vector.extract_strided_slice %11 {offsets = [9, 0], sizes = [1, 128], strides = [1, 1]} : vector<45x128xf32> to vector<1x128xf32>
    %66 = vector.extract_strided_slice %64 {offsets = [0, 0], sizes = [16, 128], strides = [1, 1]} : vector<18x128xf32> to vector<16x128xf32>
    %67 = vector.broadcast %65 : vector<1x128xf32> to vector<16x128xf32>
    %68 = arith.mulf %66, %67 : vector<16x128xf32>
    %69 = arith.addf %63, %68 : vector<16x128xf32>
    %70 = vector.extract_strided_slice %11 {offsets = [10, 0], sizes = [1, 128], strides = [1, 1]} : vector<45x128xf32> to vector<1x128xf32>
    %71 = vector.extract_strided_slice %64 {offsets = [1, 0], sizes = [16, 128], strides = [1, 1]} : vector<18x128xf32> to vector<16x128xf32>
    %72 = vector.broadcast %70 : vector<1x128xf32> to vector<16x128xf32>
    %73 = arith.mulf %71, %72 : vector<16x128xf32>
    %74 = arith.addf %69, %73 : vector<16x128xf32>
    %75 = vector.extract_strided_slice %11 {offsets = [11, 0], sizes = [1, 128], strides = [1, 1]} : vector<45x128xf32> to vector<1x128xf32>
    %76 = vector.extract_strided_slice %64 {offsets = [2, 0], sizes = [16, 128], strides = [1, 1]} : vector<18x128xf32> to vector<16x128xf32>
    %77 = vector.broadcast %75 : vector<1x128xf32> to vector<16x128xf32>
    %78 = arith.mulf %76, %77 : vector<16x128xf32>
    %79 = arith.addf %74, %78 : vector<16x128xf32>
    %c3_i32 = arith.constant 3 : i32
    %80 = tpu.dynamic_rotate %14 by %c3_i32 dim 1 : vector<18x128xf32>, i32 -> vector<18x128xf32>
    %81 = vector.extract_strided_slice %11 {offsets = [12, 0], sizes = [1, 128], strides = [1, 1]} : vector<45x128xf32> to vector<1x128xf32>
    %82 = vector.extract_strided_slice %80 {offsets = [0, 0], sizes = [16, 128], strides = [1, 1]} : vector<18x128xf32> to vector<16x128xf32>
    %83 = vector.broadcast %81 : vector<1x128xf32> to vector<16x128xf32>
    %84 = arith.mulf %82, %83 : vector<16x128xf32>
    %85 = arith.addf %79, %84 : vector<16x128xf32>
    %86 = vector.extract_strided_slice %11 {offsets = [13, 0], sizes = [1, 128], strides = [1, 1]} : vector<45x128xf32> to vector<1x128xf32>
    %87 = vector.extract_strided_slice %80 {offsets = [1, 0], sizes = [16, 128], strides = [1, 1]} : vector<18x128xf32> to vector<16x128xf32>
    %88 = vector.broadcast %86 : vector<1x128xf32> to vector<16x128xf32>
    %89 = arith.mulf %87, %88 : vector<16x128xf32>
    %90 = arith.addf %85, %89 : vector<16x128xf32>
    %91 = vector.extract_strided_slice %11 {offsets = [14, 0], sizes = [1, 128], strides = [1, 1]} : vector<45x128xf32> to vector<1x128xf32>
    %92 = vector.extract_strided_slice %80 {offsets = [2, 0], sizes = [16, 128], strides = [1, 1]} : vector<18x128xf32> to vector<16x128xf32>
    %93 = vector.broadcast %91 : vector<1x128xf32> to vector<16x128xf32>
    %94 = arith.mulf %92, %93 : vector<16x128xf32>
    %95 = arith.addf %90, %94 : vector<16x128xf32>
    %c2_i32 = arith.constant 2 : i32
    %96 = tpu.dynamic_rotate %14 by %c2_i32 dim 1 : vector<18x128xf32>, i32 -> vector<18x128xf32>
    %97 = vector.extract_strided_slice %11 {offsets = [15, 0], sizes = [1, 128], strides = [1, 1]} : vector<45x128xf32> to vector<1x128xf32>
    %98 = vector.extract_strided_slice %96 {offsets = [0, 0], sizes = [16, 128], strides = [1, 1]} : vector<18x128xf32> to vector<16x128xf32>
    %99 = vector.broadcast %97 : vector<1x128xf32> to vector<16x128xf32>
    %100 = arith.mulf %98, %99 : vector<16x128xf32>
    %101 = arith.addf %95, %100 : vector<16x128xf32>
    %102 = vector.extract_strided_slice %11 {offsets = [16, 0], sizes = [1, 128], strides = [1, 1]} : vector<45x128xf32> to vector<1x128xf32>
    %103 = vector.extract_strided_slice %96 {offsets = [1, 0], sizes = [16, 128], strides = [1, 1]} : vector<18x128xf32> to vector<16x128xf32>
    %104 = vector.broadcast %102 : vector<1x128xf32> to vector<16x128xf32>
    %105 = arith.mulf %103, %104 : vector<16x128xf32>
    %106 = arith.addf %101, %105 : vector<16x128xf32>
    %107 = vector.extract_strided_slice %11 {offsets = [17, 0], sizes = [1, 128], strides = [1, 1]} : vector<45x128xf32> to vector<1x128xf32>
    %108 = vector.extract_strided_slice %96 {offsets = [2, 0], sizes = [16, 128], strides = [1, 1]} : vector<18x128xf32> to vector<16x128xf32>
    %109 = vector.broadcast %107 : vector<1x128xf32> to vector<16x128xf32>
    %110 = arith.mulf %108, %109 : vector<16x128xf32>
    %111 = arith.addf %106, %110 : vector<16x128xf32>
    %c1_i32 = arith.constant 1 : i32
    %112 = tpu.dynamic_rotate %14 by %c1_i32 dim 1 : vector<18x128xf32>, i32 -> vector<18x128xf32>
    %113 = vector.extract_strided_slice %11 {offsets = [18, 0], sizes = [1, 128], strides = [1, 1]} : vector<45x128xf32> to vector<1x128xf32>
    %114 = vector.extract_strided_slice %112 {offsets = [0, 0], sizes = [16, 128], strides = [1, 1]} : vector<18x128xf32> to vector<16x128xf32>
    %115 = vector.broadcast %113 : vector<1x128xf32> to vector<16x128xf32>
    %116 = arith.mulf %114, %115 : vector<16x128xf32>
    %117 = arith.addf %111, %116 : vector<16x128xf32>
    %118 = vector.extract_strided_slice %11 {offsets = [19, 0], sizes = [1, 128], strides = [1, 1]} : vector<45x128xf32> to vector<1x128xf32>
    %119 = vector.extract_strided_slice %112 {offsets = [1, 0], sizes = [16, 128], strides = [1, 1]} : vector<18x128xf32> to vector<16x128xf32>
    %120 = vector.broadcast %118 : vector<1x128xf32> to vector<16x128xf32>
    %121 = arith.mulf %119, %120 : vector<16x128xf32>
    %122 = arith.addf %117, %121 : vector<16x128xf32>
    %123 = vector.extract_strided_slice %11 {offsets = [20, 0], sizes = [1, 128], strides = [1, 1]} : vector<45x128xf32> to vector<1x128xf32>
    %124 = vector.extract_strided_slice %112 {offsets = [2, 0], sizes = [16, 128], strides = [1, 1]} : vector<18x128xf32> to vector<16x128xf32>
    %125 = vector.broadcast %123 : vector<1x128xf32> to vector<16x128xf32>
    %126 = arith.mulf %124, %125 : vector<16x128xf32>
    %127 = arith.addf %122, %126 : vector<16x128xf32>
    %128 = vector.extract_strided_slice %11 {offsets = [21, 0], sizes = [1, 128], strides = [1, 1]} : vector<45x128xf32> to vector<1x128xf32>
    %129 = vector.extract_strided_slice %14 {offsets = [0, 0], sizes = [16, 128], strides = [1, 1]} : vector<18x128xf32> to vector<16x128xf32>
    %130 = vector.broadcast %128 : vector<1x128xf32> to vector<16x128xf32>
    %131 = arith.mulf %129, %130 : vector<16x128xf32>
    %132 = arith.addf %127, %131 : vector<16x128xf32>
    %133 = vector.extract_strided_slice %11 {offsets = [22, 0], sizes = [1, 128], strides = [1, 1]} : vector<45x128xf32> to vector<1x128xf32>
    %134 = vector.extract_strided_slice %14 {offsets = [1, 0], sizes = [16, 128], strides = [1, 1]} : vector<18x128xf32> to vector<16x128xf32>
    %135 = vector.broadcast %133 : vector<1x128xf32> to vector<16x128xf32>
    %136 = arith.mulf %134, %135 : vector<16x128xf32>
    %137 = arith.addf %132, %136 : vector<16x128xf32>
    %138 = vector.extract_strided_slice %11 {offsets = [23, 0], sizes = [1, 128], strides = [1, 1]} : vector<45x128xf32> to vector<1x128xf32>
    %139 = vector.extract_strided_slice %14 {offsets = [2, 0], sizes = [16, 128], strides = [1, 1]} : vector<18x128xf32> to vector<16x128xf32>
    %140 = vector.broadcast %138 : vector<1x128xf32> to vector<16x128xf32>
    %141 = arith.mulf %139, %140 : vector<16x128xf32>
    %142 = arith.addf %137, %141 : vector<16x128xf32>
    %c127_i32 = arith.constant 127 : i32
    %143 = tpu.dynamic_rotate %14 by %c127_i32 dim 1 : vector<18x128xf32>, i32 -> vector<18x128xf32>
    %144 = vector.extract_strided_slice %11 {offsets = [24, 0], sizes = [1, 128], strides = [1, 1]} : vector<45x128xf32> to vector<1x128xf32>
    %145 = vector.extract_strided_slice %143 {offsets = [0, 0], sizes = [16, 128], strides = [1, 1]} : vector<18x128xf32> to vector<16x128xf32>
    %146 = vector.broadcast %144 : vector<1x128xf32> to vector<16x128xf32>
    %147 = arith.mulf %145, %146 : vector<16x128xf32>
    %148 = arith.addf %142, %147 : vector<16x128xf32>
    %149 = vector.extract_strided_slice %11 {offsets = [25, 0], sizes = [1, 128], strides = [1, 1]} : vector<45x128xf32> to vector<1x128xf32>
    %150 = vector.extract_strided_slice %143 {offsets = [1, 0], sizes = [16, 128], strides = [1, 1]} : vector<18x128xf32> to vector<16x128xf32>
    %151 = vector.broadcast %149 : vector<1x128xf32> to vector<16x128xf32>
    %152 = arith.mulf %150, %151 : vector<16x128xf32>
    %153 = arith.addf %148, %152 : vector<16x128xf32>
    %154 = vector.extract_strided_slice %11 {offsets = [26, 0], sizes = [1, 128], strides = [1, 1]} : vector<45x128xf32> to vector<1x128xf32>
    %155 = vector.extract_strided_slice %143 {offsets = [2, 0], sizes = [16, 128], strides = [1, 1]} : vector<18x128xf32> to vector<16x128xf32>
    %156 = vector.broadcast %154 : vector<1x128xf32> to vector<16x128xf32>
    %157 = arith.mulf %155, %156 : vector<16x128xf32>
    %158 = arith.addf %153, %157 : vector<16x128xf32>
    %c126_i32 = arith.constant 126 : i32
    %159 = tpu.dynamic_rotate %14 by %c126_i32 dim 1 : vector<18x128xf32>, i32 -> vector<18x128xf32>
    %160 = vector.extract_strided_slice %11 {offsets = [27, 0], sizes = [1, 128], strides = [1, 1]} : vector<45x128xf32> to vector<1x128xf32>
    %161 = vector.extract_strided_slice %159 {offsets = [0, 0], sizes = [16, 128], strides = [1, 1]} : vector<18x128xf32> to vector<16x128xf32>
    %162 = vector.broadcast %160 : vector<1x128xf32> to vector<16x128xf32>
    %163 = arith.mulf %161, %162 : vector<16x128xf32>
    %164 = arith.addf %158, %163 : vector<16x128xf32>
    %165 = vector.extract_strided_slice %11 {offsets = [28, 0], sizes = [1, 128], strides = [1, 1]} : vector<45x128xf32> to vector<1x128xf32>
    %166 = vector.extract_strided_slice %159 {offsets = [1, 0], sizes = [16, 128], strides = [1, 1]} : vector<18x128xf32> to vector<16x128xf32>
    %167 = vector.broadcast %165 : vector<1x128xf32> to vector<16x128xf32>
    %168 = arith.mulf %166, %167 : vector<16x128xf32>
    %169 = arith.addf %164, %168 : vector<16x128xf32>
    %170 = vector.extract_strided_slice %11 {offsets = [29, 0], sizes = [1, 128], strides = [1, 1]} : vector<45x128xf32> to vector<1x128xf32>
    %171 = vector.extract_strided_slice %159 {offsets = [2, 0], sizes = [16, 128], strides = [1, 1]} : vector<18x128xf32> to vector<16x128xf32>
    %172 = vector.broadcast %170 : vector<1x128xf32> to vector<16x128xf32>
    %173 = arith.mulf %171, %172 : vector<16x128xf32>
    %174 = arith.addf %169, %173 : vector<16x128xf32>
    %c125_i32 = arith.constant 125 : i32
    %175 = tpu.dynamic_rotate %14 by %c125_i32 dim 1 : vector<18x128xf32>, i32 -> vector<18x128xf32>
    %176 = vector.extract_strided_slice %11 {offsets = [30, 0], sizes = [1, 128], strides = [1, 1]} : vector<45x128xf32> to vector<1x128xf32>
    %177 = vector.extract_strided_slice %175 {offsets = [0, 0], sizes = [16, 128], strides = [1, 1]} : vector<18x128xf32> to vector<16x128xf32>
    %178 = vector.broadcast %176 : vector<1x128xf32> to vector<16x128xf32>
    %179 = arith.mulf %177, %178 : vector<16x128xf32>
    %180 = arith.addf %174, %179 : vector<16x128xf32>
    %181 = vector.extract_strided_slice %11 {offsets = [31, 0], sizes = [1, 128], strides = [1, 1]} : vector<45x128xf32> to vector<1x128xf32>
    %182 = vector.extract_strided_slice %175 {offsets = [1, 0], sizes = [16, 128], strides = [1, 1]} : vector<18x128xf32> to vector<16x128xf32>
    %183 = vector.broadcast %181 : vector<1x128xf32> to vector<16x128xf32>
    %184 = arith.mulf %182, %183 : vector<16x128xf32>
    %185 = arith.addf %180, %184 : vector<16x128xf32>
    %186 = vector.extract_strided_slice %11 {offsets = [32, 0], sizes = [1, 128], strides = [1, 1]} : vector<45x128xf32> to vector<1x128xf32>
    %187 = vector.extract_strided_slice %175 {offsets = [2, 0], sizes = [16, 128], strides = [1, 1]} : vector<18x128xf32> to vector<16x128xf32>
    %188 = vector.broadcast %186 : vector<1x128xf32> to vector<16x128xf32>
    %189 = arith.mulf %187, %188 : vector<16x128xf32>
    %190 = arith.addf %185, %189 : vector<16x128xf32>
    %c124_i32 = arith.constant 124 : i32
    %191 = tpu.dynamic_rotate %14 by %c124_i32 dim 1 : vector<18x128xf32>, i32 -> vector<18x128xf32>
    %192 = vector.extract_strided_slice %11 {offsets = [33, 0], sizes = [1, 128], strides = [1, 1]} : vector<45x128xf32> to vector<1x128xf32>
    %193 = vector.extract_strided_slice %191 {offsets = [0, 0], sizes = [16, 128], strides = [1, 1]} : vector<18x128xf32> to vector<16x128xf32>
    %194 = vector.broadcast %192 : vector<1x128xf32> to vector<16x128xf32>
    %195 = arith.mulf %193, %194 : vector<16x128xf32>
    %196 = arith.addf %190, %195 : vector<16x128xf32>
    %197 = vector.extract_strided_slice %11 {offsets = [34, 0], sizes = [1, 128], strides = [1, 1]} : vector<45x128xf32> to vector<1x128xf32>
    %198 = vector.extract_strided_slice %191 {offsets = [1, 0], sizes = [16, 128], strides = [1, 1]} : vector<18x128xf32> to vector<16x128xf32>
    %199 = vector.broadcast %197 : vector<1x128xf32> to vector<16x128xf32>
    %200 = arith.mulf %198, %199 : vector<16x128xf32>
    %201 = arith.addf %196, %200 : vector<16x128xf32>
    %202 = vector.extract_strided_slice %11 {offsets = [35, 0], sizes = [1, 128], strides = [1, 1]} : vector<45x128xf32> to vector<1x128xf32>
    %203 = vector.extract_strided_slice %191 {offsets = [2, 0], sizes = [16, 128], strides = [1, 1]} : vector<18x128xf32> to vector<16x128xf32>
    %204 = vector.broadcast %202 : vector<1x128xf32> to vector<16x128xf32>
    %205 = arith.mulf %203, %204 : vector<16x128xf32>
    %206 = arith.addf %201, %205 : vector<16x128xf32>
    %c123_i32 = arith.constant 123 : i32
    %207 = tpu.dynamic_rotate %14 by %c123_i32 dim 1 : vector<18x128xf32>, i32 -> vector<18x128xf32>
    %208 = vector.extract_strided_slice %11 {offsets = [36, 0], sizes = [1, 128], strides = [1, 1]} : vector<45x128xf32> to vector<1x128xf32>
    %209 = vector.extract_strided_slice %207 {offsets = [0, 0], sizes = [16, 128], strides = [1, 1]} : vector<18x128xf32> to vector<16x128xf32>
    %210 = vector.broadcast %208 : vector<1x128xf32> to vector<16x128xf32>
    %211 = arith.mulf %209, %210 : vector<16x128xf32>
    %212 = arith.addf %206, %211 : vector<16x128xf32>
    %213 = vector.extract_strided_slice %11 {offsets = [37, 0], sizes = [1, 128], strides = [1, 1]} : vector<45x128xf32> to vector<1x128xf32>
    %214 = vector.extract_strided_slice %207 {offsets = [1, 0], sizes = [16, 128], strides = [1, 1]} : vector<18x128xf32> to vector<16x128xf32>
    %215 = vector.broadcast %213 : vector<1x128xf32> to vector<16x128xf32>
    %216 = arith.mulf %214, %215 : vector<16x128xf32>
    %217 = arith.addf %212, %216 : vector<16x128xf32>
    %218 = vector.extract_strided_slice %11 {offsets = [38, 0], sizes = [1, 128], strides = [1, 1]} : vector<45x128xf32> to vector<1x128xf32>
    %219 = vector.extract_strided_slice %207 {offsets = [2, 0], sizes = [16, 128], strides = [1, 1]} : vector<18x128xf32> to vector<16x128xf32>
    %220 = vector.broadcast %218 : vector<1x128xf32> to vector<16x128xf32>
    %221 = arith.mulf %219, %220 : vector<16x128xf32>
    %222 = arith.addf %217, %221 : vector<16x128xf32>
    %c122_i32 = arith.constant 122 : i32
    %223 = tpu.dynamic_rotate %14 by %c122_i32 dim 1 : vector<18x128xf32>, i32 -> vector<18x128xf32>
    %224 = vector.extract_strided_slice %11 {offsets = [39, 0], sizes = [1, 128], strides = [1, 1]} : vector<45x128xf32> to vector<1x128xf32>
    %225 = vector.extract_strided_slice %223 {offsets = [0, 0], sizes = [16, 128], strides = [1, 1]} : vector<18x128xf32> to vector<16x128xf32>
    %226 = vector.broadcast %224 : vector<1x128xf32> to vector<16x128xf32>
    %227 = arith.mulf %225, %226 : vector<16x128xf32>
    %228 = arith.addf %222, %227 : vector<16x128xf32>
    %229 = vector.extract_strided_slice %11 {offsets = [40, 0], sizes = [1, 128], strides = [1, 1]} : vector<45x128xf32> to vector<1x128xf32>
    %230 = vector.extract_strided_slice %223 {offsets = [1, 0], sizes = [16, 128], strides = [1, 1]} : vector<18x128xf32> to vector<16x128xf32>
    %231 = vector.broadcast %229 : vector<1x128xf32> to vector<16x128xf32>
    %232 = arith.mulf %230, %231 : vector<16x128xf32>
    %233 = arith.addf %228, %232 : vector<16x128xf32>
    %234 = vector.extract_strided_slice %11 {offsets = [41, 0], sizes = [1, 128], strides = [1, 1]} : vector<45x128xf32> to vector<1x128xf32>
    %235 = vector.extract_strided_slice %223 {offsets = [2, 0], sizes = [16, 128], strides = [1, 1]} : vector<18x128xf32> to vector<16x128xf32>
    %236 = vector.broadcast %234 : vector<1x128xf32> to vector<16x128xf32>
    %237 = arith.mulf %235, %236 : vector<16x128xf32>
    %238 = arith.addf %233, %237 : vector<16x128xf32>
    %c121_i32 = arith.constant 121 : i32
    %239 = tpu.dynamic_rotate %14 by %c121_i32 dim 1 : vector<18x128xf32>, i32 -> vector<18x128xf32>
    %240 = vector.extract_strided_slice %11 {offsets = [42, 0], sizes = [1, 128], strides = [1, 1]} : vector<45x128xf32> to vector<1x128xf32>
    %241 = vector.extract_strided_slice %239 {offsets = [0, 0], sizes = [16, 128], strides = [1, 1]} : vector<18x128xf32> to vector<16x128xf32>
    %242 = vector.broadcast %240 : vector<1x128xf32> to vector<16x128xf32>
    %243 = arith.mulf %241, %242 : vector<16x128xf32>
    %244 = arith.addf %238, %243 : vector<16x128xf32>
    %245 = vector.extract_strided_slice %11 {offsets = [43, 0], sizes = [1, 128], strides = [1, 1]} : vector<45x128xf32> to vector<1x128xf32>
    %246 = vector.extract_strided_slice %239 {offsets = [1, 0], sizes = [16, 128], strides = [1, 1]} : vector<18x128xf32> to vector<16x128xf32>
    %247 = vector.broadcast %245 : vector<1x128xf32> to vector<16x128xf32>
    %248 = arith.mulf %246, %247 : vector<16x128xf32>
    %249 = arith.addf %244, %248 : vector<16x128xf32>
    %250 = vector.extract_strided_slice %11 {offsets = [44, 0], sizes = [1, 128], strides = [1, 1]} : vector<45x128xf32> to vector<1x128xf32>
    %251 = vector.extract_strided_slice %239 {offsets = [2, 0], sizes = [16, 128], strides = [1, 1]} : vector<18x128xf32> to vector<16x128xf32>
    %252 = vector.broadcast %250 : vector<1x128xf32> to vector<16x128xf32>
    %253 = arith.mulf %251, %252 : vector<16x128xf32>
    %254 = arith.addf %249, %253 : vector<16x128xf32>
    %255 = vector.broadcast %4 : vector<1x128xf32> to vector<16x128xf32>
    %256 = arith.addf %254, %255 : vector<16x128xf32>
    %cst_21 = arith.constant dense<0.000000e+00> : vector<128xf32>
    %257 = vector.multi_reduction <add>, %256, %cst_21 [0] : vector<16x128xf32> to vector<128xf32>
    %258 = vector.shape_cast %257 : vector<128xf32> to vector<1x128xf32>
    %c4_i32_22 = arith.constant 4 : i32
    %259 = tpu.dynamic_rotate %258 by %c4_i32_22 dim 1 : vector<1x128xf32>, i32 -> vector<1x128xf32>
    %260 = arith.addf %258, %259 : vector<1x128xf32>
    %c8_i32 = arith.constant 8 : i32
    %261 = tpu.dynamic_rotate %260 by %c8_i32 dim 1 : vector<1x128xf32>, i32 -> vector<1x128xf32>
    %262 = arith.addf %260, %261 : vector<1x128xf32>
    %c16_i32 = arith.constant 16 : i32
    %263 = tpu.dynamic_rotate %262 by %c16_i32 dim 1 : vector<1x128xf32>, i32 -> vector<1x128xf32>
    %264 = arith.addf %262, %263 : vector<1x128xf32>
    %c32_i32 = arith.constant 32 : i32
    %265 = tpu.dynamic_rotate %264 by %c32_i32 dim 1 : vector<1x128xf32>, i32 -> vector<1x128xf32>
    %266 = arith.addf %264, %265 : vector<1x128xf32>
    %c64_i32 = arith.constant 64 : i32
    %267 = tpu.dynamic_rotate %266 by %c64_i32 dim 1 : vector<1x128xf32>, i32 -> vector<1x128xf32>
    %268 = arith.addf %266, %267 : vector<1x128xf32>
    %269 = arith.mulf %256, %256 : vector<16x128xf32>
    %cst_23 = arith.constant dense<0.000000e+00> : vector<128xf32>
    %270 = vector.multi_reduction <add>, %269, %cst_23 [0] : vector<16x128xf32> to vector<128xf32>
    %271 = vector.shape_cast %270 : vector<128xf32> to vector<1x128xf32>
    %c4_i32_24 = arith.constant 4 : i32
    %272 = tpu.dynamic_rotate %271 by %c4_i32_24 dim 1 : vector<1x128xf32>, i32 -> vector<1x128xf32>
    %273 = arith.addf %271, %272 : vector<1x128xf32>
    %c8_i32_25 = arith.constant 8 : i32
    %274 = tpu.dynamic_rotate %273 by %c8_i32_25 dim 1 : vector<1x128xf32>, i32 -> vector<1x128xf32>
    %275 = arith.addf %273, %274 : vector<1x128xf32>
    %c16_i32_26 = arith.constant 16 : i32
    %276 = tpu.dynamic_rotate %275 by %c16_i32_26 dim 1 : vector<1x128xf32>, i32 -> vector<1x128xf32>
    %277 = arith.addf %275, %276 : vector<1x128xf32>
    %c32_i32_27 = arith.constant 32 : i32
    %278 = tpu.dynamic_rotate %277 by %c32_i32_27 dim 1 : vector<1x128xf32>, i32 -> vector<1x128xf32>
    %279 = arith.addf %277, %278 : vector<1x128xf32>
    %c64_i32_28 = arith.constant 64 : i32
    %280 = tpu.dynamic_rotate %279 by %c64_i32_28 dim 1 : vector<1x128xf32>, i32 -> vector<1x128xf32>
    %281 = arith.addf %279, %280 : vector<1x128xf32>
    %cst_29 = arith.constant 0.001953125 : f32
    %282 = vector.broadcast %cst_29 : f32 to vector<1x128xf32>
    %283 = arith.mulf %268, %282 : vector<1x128xf32>
    %cst_30 = arith.constant 0.001953125 : f32
    %284 = vector.broadcast %cst_30 : f32 to vector<1x128xf32>
    %285 = arith.mulf %281, %284 : vector<1x128xf32>
    %286 = arith.mulf %283, %283 : vector<1x128xf32>
    %287 = arith.subf %285, %286 : vector<1x128xf32>
    %cst_31 = arith.constant 9.99999974E-6 : f32
    %288 = vector.broadcast %cst_31 : f32 to vector<1x128xf32>
    %289 = arith.addf %287, %288 : vector<1x128xf32>
    %290 = math.rsqrt %289 : vector<1x128xf32>
    %291 = arith.mulf %5, %290 : vector<1x128xf32>
    %292 = arith.mulf %283, %291 : vector<1x128xf32>
    %293 = arith.subf %6, %292 : vector<1x128xf32>
    %294 = vector.broadcast %291 : vector<1x128xf32> to vector<16x128xf32>
    %295 = arith.mulf %256, %294 : vector<16x128xf32>
    %296 = vector.broadcast %293 : vector<1x128xf32> to vector<16x128xf32>
    %297 = arith.addf %295, %296 : vector<16x128xf32>
    %cst_32 = arith.constant 0.000000e+00 : f32
    %298 = vector.broadcast %cst_32 : f32 to vector<16x128xf32>
    %299 = arith.maximumf %297, %298 : vector<16x128xf32>
    %cst_33 = arith.constant 0.000000e+00 : f32
    %300 = vector.broadcast %cst_33 : f32 to vector<16x128xf32>
    %301 = arith.minimumf %297, %300 : vector<16x128xf32>
    %302 = vector.broadcast %10 : vector<1x128xf32> to vector<16x128xf32>
    %303 = arith.mulf %302, %301 : vector<16x128xf32>
    %304 = arith.addf %299, %303 : vector<16x128xf32>
    %c1_34 = arith.constant 1 : index
    %c0_35 = arith.constant 0 : index
    %305 = vector.load %arg5[%c1_34, %c0_35] : memref<18x128xf32, #tpu.memory_space<vmem>>, vector<16x128xf32>
    tpu.vector_store %arg5[%c1_34, %c0_35], %304 {strides = array<i32>} : memref<18x128xf32, #tpu.memory_space<vmem>>, vector<16x128xf32>,
    %c0_36 = arith.constant 0 : index
    %c0_37 = arith.constant 0 : index
    %306 = vector.load %arg5[%c0_36, %c0_37] : memref<18x128xf32, #tpu.memory_space<vmem>>, vector<18x128xf32>
    %cst_38 = arith.constant 0.000000e+00 : f32
    %307 = vector.broadcast %cst_38 : f32 to vector<16x128xf32>
    %c7_i32_39 = arith.constant 7 : i32
    %308 = tpu.dynamic_rotate %306 by %c7_i32_39 dim 1 : vector<18x128xf32>, i32 -> vector<18x128xf32>
    %309 = vector.extract_strided_slice %12 {offsets = [0, 0], sizes = [1, 128], strides = [1, 1]} : vector<45x128xf32> to vector<1x128xf32>
    %310 = vector.extract_strided_slice %308 {offsets = [0, 0], sizes = [16, 128], strides = [1, 1]} : vector<18x128xf32> to vector<16x128xf32>
    %311 = vector.broadcast %309 : vector<1x128xf32> to vector<16x128xf32>
    %312 = arith.mulf %310, %311 : vector<16x128xf32>
    %313 = arith.addf %307, %312 : vector<16x128xf32>
    %314 = vector.extract_strided_slice %12 {offsets = [1, 0], sizes = [1, 128], strides = [1, 1]} : vector<45x128xf32> to vector<1x128xf32>
    %315 = vector.extract_strided_slice %308 {offsets = [1, 0], sizes = [16, 128], strides = [1, 1]} : vector<18x128xf32> to vector<16x128xf32>
    %316 = vector.broadcast %314 : vector<1x128xf32> to vector<16x128xf32>
    %317 = arith.mulf %315, %316 : vector<16x128xf32>
    %318 = arith.addf %313, %317 : vector<16x128xf32>
    %319 = vector.extract_strided_slice %12 {offsets = [2, 0], sizes = [1, 128], strides = [1, 1]} : vector<45x128xf32> to vector<1x128xf32>
    %320 = vector.extract_strided_slice %308 {offsets = [2, 0], sizes = [16, 128], strides = [1, 1]} : vector<18x128xf32> to vector<16x128xf32>
    %321 = vector.broadcast %319 : vector<1x128xf32> to vector<16x128xf32>
    %322 = arith.mulf %320, %321 : vector<16x128xf32>
    %323 = arith.addf %318, %322 : vector<16x128xf32>
    %c6_i32_40 = arith.constant 6 : i32
    %324 = tpu.dynamic_rotate %306 by %c6_i32_40 dim 1 : vector<18x128xf32>, i32 -> vector<18x128xf32>
    %325 = vector.extract_strided_slice %12 {offsets = [3, 0], sizes = [1, 128], strides = [1, 1]} : vector<45x128xf32> to vector<1x128xf32>
    %326 = vector.extract_strided_slice %324 {offsets = [0, 0], sizes = [16, 128], strides = [1, 1]} : vector<18x128xf32> to vector<16x128xf32>
    %327 = vector.broadcast %325 : vector<1x128xf32> to vector<16x128xf32>
    %328 = arith.mulf %326, %327 : vector<16x128xf32>
    %329 = arith.addf %323, %328 : vector<16x128xf32>
    %330 = vector.extract_strided_slice %12 {offsets = [4, 0], sizes = [1, 128], strides = [1, 1]} : vector<45x128xf32> to vector<1x128xf32>
    %331 = vector.extract_strided_slice %324 {offsets = [1, 0], sizes = [16, 128], strides = [1, 1]} : vector<18x128xf32> to vector<16x128xf32>
    %332 = vector.broadcast %330 : vector<1x128xf32> to vector<16x128xf32>
    %333 = arith.mulf %331, %332 : vector<16x128xf32>
    %334 = arith.addf %329, %333 : vector<16x128xf32>
    %335 = vector.extract_strided_slice %12 {offsets = [5, 0], sizes = [1, 128], strides = [1, 1]} : vector<45x128xf32> to vector<1x128xf32>
    %336 = vector.extract_strided_slice %324 {offsets = [2, 0], sizes = [16, 128], strides = [1, 1]} : vector<18x128xf32> to vector<16x128xf32>
    %337 = vector.broadcast %335 : vector<1x128xf32> to vector<16x128xf32>
    %338 = arith.mulf %336, %337 : vector<16x128xf32>
    %339 = arith.addf %334, %338 : vector<16x128xf32>
    %c5_i32_41 = arith.constant 5 : i32
    %340 = tpu.dynamic_rotate %306 by %c5_i32_41 dim 1 : vector<18x128xf32>, i32 -> vector<18x128xf32>
    %341 = vector.extract_strided_slice %12 {offsets = [6, 0], sizes = [1, 128], strides = [1, 1]} : vector<45x128xf32> to vector<1x128xf32>
    %342 = vector.extract_strided_slice %340 {offsets = [0, 0], sizes = [16, 128], strides = [1, 1]} : vector<18x128xf32> to vector<16x128xf32>
    %343 = vector.broadcast %341 : vector<1x128xf32> to vector<16x128xf32>
    %344 = arith.mulf %342, %343 : vector<16x128xf32>
    %345 = arith.addf %339, %344 : vector<16x128xf32>
    %346 = vector.extract_strided_slice %12 {offsets = [7, 0], sizes = [1, 128], strides = [1, 1]} : vector<45x128xf32> to vector<1x128xf32>
    %347 = vector.extract_strided_slice %340 {offsets = [1, 0], sizes = [16, 128], strides = [1, 1]} : vector<18x128xf32> to vector<16x128xf32>
    %348 = vector.broadcast %346 : vector<1x128xf32> to vector<16x128xf32>
    %349 = arith.mulf %347, %348 : vector<16x128xf32>
    %350 = arith.addf %345, %349 : vector<16x128xf32>
    %351 = vector.extract_strided_slice %12 {offsets = [8, 0], sizes = [1, 128], strides = [1, 1]} : vector<45x128xf32> to vector<1x128xf32>
    %352 = vector.extract_strided_slice %340 {offsets = [2, 0], sizes = [16, 128], strides = [1, 1]} : vector<18x128xf32> to vector<16x128xf32>
    %353 = vector.broadcast %351 : vector<1x128xf32> to vector<16x128xf32>
    %354 = arith.mulf %352, %353 : vector<16x128xf32>
    %355 = arith.addf %350, %354 : vector<16x128xf32>
    %c4_i32_42 = arith.constant 4 : i32
    %356 = tpu.dynamic_rotate %306 by %c4_i32_42 dim 1 : vector<18x128xf32>, i32 -> vector<18x128xf32>
    %357 = vector.extract_strided_slice %12 {offsets = [9, 0], sizes = [1, 128], strides = [1, 1]} : vector<45x128xf32> to vector<1x128xf32>
    %358 = vector.extract_strided_slice %356 {offsets = [0, 0], sizes = [16, 128], strides = [1, 1]} : vector<18x128xf32> to vector<16x128xf32>
    %359 = vector.broadcast %357 : vector<1x128xf32> to vector<16x128xf32>
    %360 = arith.mulf %358, %359 : vector<16x128xf32>
    %361 = arith.addf %355, %360 : vector<16x128xf32>
    %362 = vector.extract_strided_slice %12 {offsets = [10, 0], sizes = [1, 128], strides = [1, 1]} : vector<45x128xf32> to vector<1x128xf32>
    %363 = vector.extract_strided_slice %356 {offsets = [1, 0], sizes = [16, 128], strides = [1, 1]} : vector<18x128xf32> to vector<16x128xf32>
    %364 = vector.broadcast %362 : vector<1x128xf32> to vector<16x128xf32>
    %365 = arith.mulf %363, %364 : vector<16x128xf32>
    %366 = arith.addf %361, %365 : vector<16x128xf32>
    %367 = vector.extract_strided_slice %12 {offsets = [11, 0], sizes = [1, 128], strides = [1, 1]} : vector<45x128xf32> to vector<1x128xf32>
    %368 = vector.extract_strided_slice %356 {offsets = [2, 0], sizes = [16, 128], strides = [1, 1]} : vector<18x128xf32> to vector<16x128xf32>
    %369 = vector.broadcast %367 : vector<1x128xf32> to vector<16x128xf32>
    %370 = arith.mulf %368, %369 : vector<16x128xf32>
    %371 = arith.addf %366, %370 : vector<16x128xf32>
    %c3_i32_43 = arith.constant 3 : i32
    %372 = tpu.dynamic_rotate %306 by %c3_i32_43 dim 1 : vector<18x128xf32>, i32 -> vector<18x128xf32>
    %373 = vector.extract_strided_slice %12 {offsets = [12, 0], sizes = [1, 128], strides = [1, 1]} : vector<45x128xf32> to vector<1x128xf32>
    %374 = vector.extract_strided_slice %372 {offsets = [0, 0], sizes = [16, 128], strides = [1, 1]} : vector<18x128xf32> to vector<16x128xf32>
    %375 = vector.broadcast %373 : vector<1x128xf32> to vector<16x128xf32>
    %376 = arith.mulf %374, %375 : vector<16x128xf32>
    %377 = arith.addf %371, %376 : vector<16x128xf32>
    %378 = vector.extract_strided_slice %12 {offsets = [13, 0], sizes = [1, 128], strides = [1, 1]} : vector<45x128xf32> to vector<1x128xf32>
    %379 = vector.extract_strided_slice %372 {offsets = [1, 0], sizes = [16, 128], strides = [1, 1]} : vector<18x128xf32> to vector<16x128xf32>
    %380 = vector.broadcast %378 : vector<1x128xf32> to vector<16x128xf32>
    %381 = arith.mulf %379, %380 : vector<16x128xf32>
    %382 = arith.addf %377, %381 : vector<16x128xf32>
    %383 = vector.extract_strided_slice %12 {offsets = [14, 0], sizes = [1, 128], strides = [1, 1]} : vector<45x128xf32> to vector<1x128xf32>
    %384 = vector.extract_strided_slice %372 {offsets = [2, 0], sizes = [16, 128], strides = [1, 1]} : vector<18x128xf32> to vector<16x128xf32>
    %385 = vector.broadcast %383 : vector<1x128xf32> to vector<16x128xf32>
    %386 = arith.mulf %384, %385 : vector<16x128xf32>
    %387 = arith.addf %382, %386 : vector<16x128xf32>
    %c2_i32_44 = arith.constant 2 : i32
    %388 = tpu.dynamic_rotate %306 by %c2_i32_44 dim 1 : vector<18x128xf32>, i32 -> vector<18x128xf32>
    %389 = vector.extract_strided_slice %12 {offsets = [15, 0], sizes = [1, 128], strides = [1, 1]} : vector<45x128xf32> to vector<1x128xf32>
    %390 = vector.extract_strided_slice %388 {offsets = [0, 0], sizes = [16, 128], strides = [1, 1]} : vector<18x128xf32> to vector<16x128xf32>
    %391 = vector.broadcast %389 : vector<1x128xf32> to vector<16x128xf32>
    %392 = arith.mulf %390, %391 : vector<16x128xf32>
    %393 = arith.addf %387, %392 : vector<16x128xf32>
    %394 = vector.extract_strided_slice %12 {offsets = [16, 0], sizes = [1, 128], strides = [1, 1]} : vector<45x128xf32> to vector<1x128xf32>
    %395 = vector.extract_strided_slice %388 {offsets = [1, 0], sizes = [16, 128], strides = [1, 1]} : vector<18x128xf32> to vector<16x128xf32>
    %396 = vector.broadcast %394 : vector<1x128xf32> to vector<16x128xf32>
    %397 = arith.mulf %395, %396 : vector<16x128xf32>
    %398 = arith.addf %393, %397 : vector<16x128xf32>
    %399 = vector.extract_strided_slice %12 {offsets = [17, 0], sizes = [1, 128], strides = [1, 1]} : vector<45x128xf32> to vector<1x128xf32>
    %400 = vector.extract_strided_slice %388 {offsets = [2, 0], sizes = [16, 128], strides = [1, 1]} : vector<18x128xf32> to vector<16x128xf32>
    %401 = vector.broadcast %399 : vector<1x128xf32> to vector<16x128xf32>
    %402 = arith.mulf %400, %401 : vector<16x128xf32>
    %403 = arith.addf %398, %402 : vector<16x128xf32>
    %c1_i32_45 = arith.constant 1 : i32
    %404 = tpu.dynamic_rotate %306 by %c1_i32_45 dim 1 : vector<18x128xf32>, i32 -> vector<18x128xf32>
    %405 = vector.extract_strided_slice %12 {offsets = [18, 0], sizes = [1, 128], strides = [1, 1]} : vector<45x128xf32> to vector<1x128xf32>
    %406 = vector.extract_strided_slice %404 {offsets = [0, 0], sizes = [16, 128], strides = [1, 1]} : vector<18x128xf32> to vector<16x128xf32>
    %407 = vector.broadcast %405 : vector<1x128xf32> to vector<16x128xf32>
    %408 = arith.mulf %406, %407 : vector<16x128xf32>
    %409 = arith.addf %403, %408 : vector<16x128xf32>
    %410 = vector.extract_strided_slice %12 {offsets = [19, 0], sizes = [1, 128], strides = [1, 1]} : vector<45x128xf32> to vector<1x128xf32>
    %411 = vector.extract_strided_slice %404 {offsets = [1, 0], sizes = [16, 128], strides = [1, 1]} : vector<18x128xf32> to vector<16x128xf32>
    %412 = vector.broadcast %410 : vector<1x128xf32> to vector<16x128xf32>
    %413 = arith.mulf %411, %412 : vector<16x128xf32>
    %414 = arith.addf %409, %413 : vector<16x128xf32>
    %415 = vector.extract_strided_slice %12 {offsets = [20, 0], sizes = [1, 128], strides = [1, 1]} : vector<45x128xf32> to vector<1x128xf32>
    %416 = vector.extract_strided_slice %404 {offsets = [2, 0], sizes = [16, 128], strides = [1, 1]} : vector<18x128xf32> to vector<16x128xf32>
    %417 = vector.broadcast %415 : vector<1x128xf32> to vector<16x128xf32>
    %418 = arith.mulf %416, %417 : vector<16x128xf32>
    %419 = arith.addf %414, %418 : vector<16x128xf32>
    %420 = vector.extract_strided_slice %12 {offsets = [21, 0], sizes = [1, 128], strides = [1, 1]} : vector<45x128xf32> to vector<1x128xf32>
    %421 = vector.extract_strided_slice %306 {offsets = [0, 0], sizes = [16, 128], strides = [1, 1]} : vector<18x128xf32> to vector<16x128xf32>
    %422 = vector.broadcast %420 : vector<1x128xf32> to vector<16x128xf32>
    %423 = arith.mulf %421, %422 : vector<16x128xf32>
    %424 = arith.addf %419, %423 : vector<16x128xf32>
    %425 = vector.extract_strided_slice %12 {offsets = [22, 0], sizes = [1, 128], strides = [1, 1]} : vector<45x128xf32> to vector<1x128xf32>
    %426 = vector.extract_strided_slice %306 {offsets = [1, 0], sizes = [16, 128], strides = [1, 1]} : vector<18x128xf32> to vector<16x128xf32>
    %427 = vector.broadcast %425 : vector<1x128xf32> to vector<16x128xf32>
    %428 = arith.mulf %426, %427 : vector<16x128xf32>
    %429 = arith.addf %424, %428 : vector<16x128xf32>
    %430 = vector.extract_strided_slice %12 {offsets = [23, 0], sizes = [1, 128], strides = [1, 1]} : vector<45x128xf32> to vector<1x128xf32>
    %431 = vector.extract_strided_slice %306 {offsets = [2, 0], sizes = [16, 128], strides = [1, 1]} : vector<18x128xf32> to vector<16x128xf32>
    %432 = vector.broadcast %430 : vector<1x128xf32> to vector<16x128xf32>
    %433 = arith.mulf %431, %432 : vector<16x128xf32>
    %434 = arith.addf %429, %433 : vector<16x128xf32>
    %c127_i32_46 = arith.constant 127 : i32
    %435 = tpu.dynamic_rotate %306 by %c127_i32_46 dim 1 : vector<18x128xf32>, i32 -> vector<18x128xf32>
    %436 = vector.extract_strided_slice %12 {offsets = [24, 0], sizes = [1, 128], strides = [1, 1]} : vector<45x128xf32> to vector<1x128xf32>
    %437 = vector.extract_strided_slice %435 {offsets = [0, 0], sizes = [16, 128], strides = [1, 1]} : vector<18x128xf32> to vector<16x128xf32>
    %438 = vector.broadcast %436 : vector<1x128xf32> to vector<16x128xf32>
    %439 = arith.mulf %437, %438 : vector<16x128xf32>
    %440 = arith.addf %434, %439 : vector<16x128xf32>
    %441 = vector.extract_strided_slice %12 {offsets = [25, 0], sizes = [1, 128], strides = [1, 1]} : vector<45x128xf32> to vector<1x128xf32>
    %442 = vector.extract_strided_slice %435 {offsets = [1, 0], sizes = [16, 128], strides = [1, 1]} : vector<18x128xf32> to vector<16x128xf32>
    %443 = vector.broadcast %441 : vector<1x128xf32> to vector<16x128xf32>
    %444 = arith.mulf %442, %443 : vector<16x128xf32>
    %445 = arith.addf %440, %444 : vector<16x128xf32>
    %446 = vector.extract_strided_slice %12 {offsets = [26, 0], sizes = [1, 128], strides = [1, 1]} : vector<45x128xf32> to vector<1x128xf32>
    %447 = vector.extract_strided_slice %435 {offsets = [2, 0], sizes = [16, 128], strides = [1, 1]} : vector<18x128xf32> to vector<16x128xf32>
    %448 = vector.broadcast %446 : vector<1x128xf32> to vector<16x128xf32>
    %449 = arith.mulf %447, %448 : vector<16x128xf32>
    %450 = arith.addf %445, %449 : vector<16x128xf32>
    %c126_i32_47 = arith.constant 126 : i32
    %451 = tpu.dynamic_rotate %306 by %c126_i32_47 dim 1 : vector<18x128xf32>, i32 -> vector<18x128xf32>
    %452 = vector.extract_strided_slice %12 {offsets = [27, 0], sizes = [1, 128], strides = [1, 1]} : vector<45x128xf32> to vector<1x128xf32>
    %453 = vector.extract_strided_slice %451 {offsets = [0, 0], sizes = [16, 128], strides = [1, 1]} : vector<18x128xf32> to vector<16x128xf32>
    %454 = vector.broadcast %452 : vector<1x128xf32> to vector<16x128xf32>
    %455 = arith.mulf %453, %454 : vector<16x128xf32>
    %456 = arith.addf %450, %455 : vector<16x128xf32>
    %457 = vector.extract_strided_slice %12 {offsets = [28, 0], sizes = [1, 128], strides = [1, 1]} : vector<45x128xf32> to vector<1x128xf32>
    %458 = vector.extract_strided_slice %451 {offsets = [1, 0], sizes = [16, 128], strides = [1, 1]} : vector<18x128xf32> to vector<16x128xf32>
    %459 = vector.broadcast %457 : vector<1x128xf32> to vector<16x128xf32>
    %460 = arith.mulf %458, %459 : vector<16x128xf32>
    %461 = arith.addf %456, %460 : vector<16x128xf32>
    %462 = vector.extract_strided_slice %12 {offsets = [29, 0], sizes = [1, 128], strides = [1, 1]} : vector<45x128xf32> to vector<1x128xf32>
    %463 = vector.extract_strided_slice %451 {offsets = [2, 0], sizes = [16, 128], strides = [1, 1]} : vector<18x128xf32> to vector<16x128xf32>
    %464 = vector.broadcast %462 : vector<1x128xf32> to vector<16x128xf32>
    %465 = arith.mulf %463, %464 : vector<16x128xf32>
    %466 = arith.addf %461, %465 : vector<16x128xf32>
    %c125_i32_48 = arith.constant 125 : i32
    %467 = tpu.dynamic_rotate %306 by %c125_i32_48 dim 1 : vector<18x128xf32>, i32 -> vector<18x128xf32>
    %468 = vector.extract_strided_slice %12 {offsets = [30, 0], sizes = [1, 128], strides = [1, 1]} : vector<45x128xf32> to vector<1x128xf32>
    %469 = vector.extract_strided_slice %467 {offsets = [0, 0], sizes = [16, 128], strides = [1, 1]} : vector<18x128xf32> to vector<16x128xf32>
    %470 = vector.broadcast %468 : vector<1x128xf32> to vector<16x128xf32>
    %471 = arith.mulf %469, %470 : vector<16x128xf32>
    %472 = arith.addf %466, %471 : vector<16x128xf32>
    %473 = vector.extract_strided_slice %12 {offsets = [31, 0], sizes = [1, 128], strides = [1, 1]} : vector<45x128xf32> to vector<1x128xf32>
    %474 = vector.extract_strided_slice %467 {offsets = [1, 0], sizes = [16, 128], strides = [1, 1]} : vector<18x128xf32> to vector<16x128xf32>
    %475 = vector.broadcast %473 : vector<1x128xf32> to vector<16x128xf32>
    %476 = arith.mulf %474, %475 : vector<16x128xf32>
    %477 = arith.addf %472, %476 : vector<16x128xf32>
    %478 = vector.extract_strided_slice %12 {offsets = [32, 0], sizes = [1, 128], strides = [1, 1]} : vector<45x128xf32> to vector<1x128xf32>
    %479 = vector.extract_strided_slice %467 {offsets = [2, 0], sizes = [16, 128], strides = [1, 1]} : vector<18x128xf32> to vector<16x128xf32>
    %480 = vector.broadcast %478 : vector<1x128xf32> to vector<16x128xf32>
    %481 = arith.mulf %479, %480 : vector<16x128xf32>
    %482 = arith.addf %477, %481 : vector<16x128xf32>
    %c124_i32_49 = arith.constant 124 : i32
    %483 = tpu.dynamic_rotate %306 by %c124_i32_49 dim 1 : vector<18x128xf32>, i32 -> vector<18x128xf32>
    %484 = vector.extract_strided_slice %12 {offsets = [33, 0], sizes = [1, 128], strides = [1, 1]} : vector<45x128xf32> to vector<1x128xf32>
    %485 = vector.extract_strided_slice %483 {offsets = [0, 0], sizes = [16, 128], strides = [1, 1]} : vector<18x128xf32> to vector<16x128xf32>
    %486 = vector.broadcast %484 : vector<1x128xf32> to vector<16x128xf32>
    %487 = arith.mulf %485, %486 : vector<16x128xf32>
    %488 = arith.addf %482, %487 : vector<16x128xf32>
    %489 = vector.extract_strided_slice %12 {offsets = [34, 0], sizes = [1, 128], strides = [1, 1]} : vector<45x128xf32> to vector<1x128xf32>
    %490 = vector.extract_strided_slice %483 {offsets = [1, 0], sizes = [16, 128], strides = [1, 1]} : vector<18x128xf32> to vector<16x128xf32>
    %491 = vector.broadcast %489 : vector<1x128xf32> to vector<16x128xf32>
    %492 = arith.mulf %490, %491 : vector<16x128xf32>
    %493 = arith.addf %488, %492 : vector<16x128xf32>
    %494 = vector.extract_strided_slice %12 {offsets = [35, 0], sizes = [1, 128], strides = [1, 1]} : vector<45x128xf32> to vector<1x128xf32>
    %495 = vector.extract_strided_slice %483 {offsets = [2, 0], sizes = [16, 128], strides = [1, 1]} : vector<18x128xf32> to vector<16x128xf32>
    %496 = vector.broadcast %494 : vector<1x128xf32> to vector<16x128xf32>
    %497 = arith.mulf %495, %496 : vector<16x128xf32>
    %498 = arith.addf %493, %497 : vector<16x128xf32>
    %c123_i32_50 = arith.constant 123 : i32
    %499 = tpu.dynamic_rotate %306 by %c123_i32_50 dim 1 : vector<18x128xf32>, i32 -> vector<18x128xf32>
    %500 = vector.extract_strided_slice %12 {offsets = [36, 0], sizes = [1, 128], strides = [1, 1]} : vector<45x128xf32> to vector<1x128xf32>
    %501 = vector.extract_strided_slice %499 {offsets = [0, 0], sizes = [16, 128], strides = [1, 1]} : vector<18x128xf32> to vector<16x128xf32>
    %502 = vector.broadcast %500 : vector<1x128xf32> to vector<16x128xf32>
    %503 = arith.mulf %501, %502 : vector<16x128xf32>
    %504 = arith.addf %498, %503 : vector<16x128xf32>
    %505 = vector.extract_strided_slice %12 {offsets = [37, 0], sizes = [1, 128], strides = [1, 1]} : vector<45x128xf32> to vector<1x128xf32>
    %506 = vector.extract_strided_slice %499 {offsets = [1, 0], sizes = [16, 128], strides = [1, 1]} : vector<18x128xf32> to vector<16x128xf32>
    %507 = vector.broadcast %505 : vector<1x128xf32> to vector<16x128xf32>
    %508 = arith.mulf %506, %507 : vector<16x128xf32>
    %509 = arith.addf %504, %508 : vector<16x128xf32>
    %510 = vector.extract_strided_slice %12 {offsets = [38, 0], sizes = [1, 128], strides = [1, 1]} : vector<45x128xf32> to vector<1x128xf32>
    %511 = vector.extract_strided_slice %499 {offsets = [2, 0], sizes = [16, 128], strides = [1, 1]} : vector<18x128xf32> to vector<16x128xf32>
    %512 = vector.broadcast %510 : vector<1x128xf32> to vector<16x128xf32>
    %513 = arith.mulf %511, %512 : vector<16x128xf32>
    %514 = arith.addf %509, %513 : vector<16x128xf32>
    %c122_i32_51 = arith.constant 122 : i32
    %515 = tpu.dynamic_rotate %306 by %c122_i32_51 dim 1 : vector<18x128xf32>, i32 -> vector<18x128xf32>
    %516 = vector.extract_strided_slice %12 {offsets = [39, 0], sizes = [1, 128], strides = [1, 1]} : vector<45x128xf32> to vector<1x128xf32>
    %517 = vector.extract_strided_slice %515 {offsets = [0, 0], sizes = [16, 128], strides = [1, 1]} : vector<18x128xf32> to vector<16x128xf32>
    %518 = vector.broadcast %516 : vector<1x128xf32> to vector<16x128xf32>
    %519 = arith.mulf %517, %518 : vector<16x128xf32>
    %520 = arith.addf %514, %519 : vector<16x128xf32>
    %521 = vector.extract_strided_slice %12 {offsets = [40, 0], sizes = [1, 128], strides = [1, 1]} : vector<45x128xf32> to vector<1x128xf32>
    %522 = vector.extract_strided_slice %515 {offsets = [1, 0], sizes = [16, 128], strides = [1, 1]} : vector<18x128xf32> to vector<16x128xf32>
    %523 = vector.broadcast %521 : vector<1x128xf32> to vector<16x128xf32>
    %524 = arith.mulf %522, %523 : vector<16x128xf32>
    %525 = arith.addf %520, %524 : vector<16x128xf32>
    %526 = vector.extract_strided_slice %12 {offsets = [41, 0], sizes = [1, 128], strides = [1, 1]} : vector<45x128xf32> to vector<1x128xf32>
    %527 = vector.extract_strided_slice %515 {offsets = [2, 0], sizes = [16, 128], strides = [1, 1]} : vector<18x128xf32> to vector<16x128xf32>
    %528 = vector.broadcast %526 : vector<1x128xf32> to vector<16x128xf32>
    %529 = arith.mulf %527, %528 : vector<16x128xf32>
    %530 = arith.addf %525, %529 : vector<16x128xf32>
    %c121_i32_52 = arith.constant 121 : i32
    %531 = tpu.dynamic_rotate %306 by %c121_i32_52 dim 1 : vector<18x128xf32>, i32 -> vector<18x128xf32>
    %532 = vector.extract_strided_slice %12 {offsets = [42, 0], sizes = [1, 128], strides = [1, 1]} : vector<45x128xf32> to vector<1x128xf32>
    %533 = vector.extract_strided_slice %531 {offsets = [0, 0], sizes = [16, 128], strides = [1, 1]} : vector<18x128xf32> to vector<16x128xf32>
    %534 = vector.broadcast %532 : vector<1x128xf32> to vector<16x128xf32>
    %535 = arith.mulf %533, %534 : vector<16x128xf32>
    %536 = arith.addf %530, %535 : vector<16x128xf32>
    %537 = vector.extract_strided_slice %12 {offsets = [43, 0], sizes = [1, 128], strides = [1, 1]} : vector<45x128xf32> to vector<1x128xf32>
    %538 = vector.extract_strided_slice %531 {offsets = [1, 0], sizes = [16, 128], strides = [1, 1]} : vector<18x128xf32> to vector<16x128xf32>
    %539 = vector.broadcast %537 : vector<1x128xf32> to vector<16x128xf32>
    %540 = arith.mulf %538, %539 : vector<16x128xf32>
    %541 = arith.addf %536, %540 : vector<16x128xf32>
    %542 = vector.extract_strided_slice %12 {offsets = [44, 0], sizes = [1, 128], strides = [1, 1]} : vector<45x128xf32> to vector<1x128xf32>
    %543 = vector.extract_strided_slice %531 {offsets = [2, 0], sizes = [16, 128], strides = [1, 1]} : vector<18x128xf32> to vector<16x128xf32>
    %544 = vector.broadcast %542 : vector<1x128xf32> to vector<16x128xf32>
    %545 = arith.mulf %543, %544 : vector<16x128xf32>
    %546 = arith.addf %541, %545 : vector<16x128xf32>
    %547 = vector.broadcast %7 : vector<1x128xf32> to vector<16x128xf32>
    %548 = arith.addf %546, %547 : vector<16x128xf32>
    %cst_53 = arith.constant dense<0.000000e+00> : vector<128xf32>
    %549 = vector.multi_reduction <add>, %548, %cst_53 [0] : vector<16x128xf32> to vector<128xf32>
    %550 = vector.shape_cast %549 : vector<128xf32> to vector<1x128xf32>
    %c4_i32_54 = arith.constant 4 : i32
    %551 = tpu.dynamic_rotate %550 by %c4_i32_54 dim 1 : vector<1x128xf32>, i32 -> vector<1x128xf32>
    %552 = arith.addf %550, %551 : vector<1x128xf32>
    %c8_i32_55 = arith.constant 8 : i32
    %553 = tpu.dynamic_rotate %552 by %c8_i32_55 dim 1 : vector<1x128xf32>, i32 -> vector<1x128xf32>
    %554 = arith.addf %552, %553 : vector<1x128xf32>
    %c16_i32_56 = arith.constant 16 : i32
    %555 = tpu.dynamic_rotate %554 by %c16_i32_56 dim 1 : vector<1x128xf32>, i32 -> vector<1x128xf32>
    %556 = arith.addf %554, %555 : vector<1x128xf32>
    %c32_i32_57 = arith.constant 32 : i32
    %557 = tpu.dynamic_rotate %556 by %c32_i32_57 dim 1 : vector<1x128xf32>, i32 -> vector<1x128xf32>
    %558 = arith.addf %556, %557 : vector<1x128xf32>
    %c64_i32_58 = arith.constant 64 : i32
    %559 = tpu.dynamic_rotate %558 by %c64_i32_58 dim 1 : vector<1x128xf32>, i32 -> vector<1x128xf32>
    %560 = arith.addf %558, %559 : vector<1x128xf32>
    %561 = arith.mulf %548, %548 : vector<16x128xf32>
    %cst_59 = arith.constant dense<0.000000e+00> : vector<128xf32>
    %562 = vector.multi_reduction <add>, %561, %cst_59 [0] : vector<16x128xf32> to vector<128xf32>
    %563 = vector.shape_cast %562 : vector<128xf32> to vector<1x128xf32>
    %c4_i32_60 = arith.constant 4 : i32
    %564 = tpu.dynamic_rotate %563 by %c4_i32_60 dim 1 : vector<1x128xf32>, i32 -> vector<1x128xf32>
    %565 = arith.addf %563, %564 : vector<1x128xf32>
    %c8_i32_61 = arith.constant 8 : i32
    %566 = tpu.dynamic_rotate %565 by %c8_i32_61 dim 1 : vector<1x128xf32>, i32 -> vector<1x128xf32>
    %567 = arith.addf %565, %566 : vector<1x128xf32>
    %c16_i32_62 = arith.constant 16 : i32
    %568 = tpu.dynamic_rotate %567 by %c16_i32_62 dim 1 : vector<1x128xf32>, i32 -> vector<1x128xf32>
    %569 = arith.addf %567, %568 : vector<1x128xf32>
    %c32_i32_63 = arith.constant 32 : i32
    %570 = tpu.dynamic_rotate %569 by %c32_i32_63 dim 1 : vector<1x128xf32>, i32 -> vector<1x128xf32>
    %571 = arith.addf %569, %570 : vector<1x128xf32>
    %c64_i32_64 = arith.constant 64 : i32
    %572 = tpu.dynamic_rotate %571 by %c64_i32_64 dim 1 : vector<1x128xf32>, i32 -> vector<1x128xf32>
    %573 = arith.addf %571, %572 : vector<1x128xf32>
    %cst_65 = arith.constant 0.001953125 : f32
    %574 = vector.broadcast %cst_65 : f32 to vector<1x128xf32>
    %575 = arith.mulf %560, %574 : vector<1x128xf32>
    %cst_66 = arith.constant 0.001953125 : f32
    %576 = vector.broadcast %cst_66 : f32 to vector<1x128xf32>
    %577 = arith.mulf %573, %576 : vector<1x128xf32>
    %578 = arith.mulf %575, %575 : vector<1x128xf32>
    %579 = arith.subf %577, %578 : vector<1x128xf32>
    %cst_67 = arith.constant 9.99999974E-6 : f32
    %580 = vector.broadcast %cst_67 : f32 to vector<1x128xf32>
    %581 = arith.addf %579, %580 : vector<1x128xf32>
    %582 = math.rsqrt %581 : vector<1x128xf32>
    %583 = arith.mulf %8, %582 : vector<1x128xf32>
    %584 = arith.mulf %575, %583 : vector<1x128xf32>
    %585 = arith.subf %9, %584 : vector<1x128xf32>
    %586 = vector.broadcast %583 : vector<1x128xf32> to vector<16x128xf32>
    %587 = arith.mulf %548, %586 : vector<16x128xf32>
    %588 = vector.broadcast %585 : vector<1x128xf32> to vector<16x128xf32>
    %589 = arith.addf %587, %588 : vector<16x128xf32>
    %590 = arith.addf %589, %0 : vector<16x128xf32>
    %c0_68 = arith.constant 0 : index
    %c0_69 = arith.constant 0 : index
    %591 = vector.load %arg4[%c0_68, %c0_69] : memref<16x128xf32, #tpu.memory_space<vmem>>, vector<16x128xf32>
    tpu.vector_store %arg4[%c0_68, %c0_69], %590 {strides = array<i32>} : memref<16x128xf32, #tpu.memory_space<vmem>>, vector<16x128xf32>,
    return
  }
}

</mosaic_0001>

<llo_original>
// kernel: resblock_forward.1
$region0: #{resblock_forward.1}
  #allocation0 [shape = 'u32[]', space=smem, size = 0x4, offset = 0x4, fixed_abs, tag = 'smem constant byte address 0x4 - core index']
  #allocation1 [shape = 'u32[144,128]{1,0:T(1,128)}', space=vmem, size = 0x12000, scoped, tag = 'internal scratch']
  #allocation2 [shape = 'f32[18,128]{1,0:T(8,128)}', space=vmem, size = 0x3000, scoped, tag = 'scratch operand']
  %s0 = inlined_call_operand.vmem [shape: f32[16,128], index: 0, kind: input, shape index: {}]
  %s1 = inlined_call_operand.vmem [shape: f32[45,128], index: 1, kind: input, shape index: {}]
  %s2 = inlined_call_operand.vmem [shape: f32[45,128], index: 2, kind: input, shape index: {}]
  %s3 = inlined_call_operand.vmem [shape: f32[8,128], index: 3, kind: input, shape index: {}]
  %s4 = inlined_call_operand.vmem [shape: f32[16,128], index: 4, kind: output, shape index: {}]
  %s5 = sld [smem:[#allocation0]]
  $region26: #{resblock_forward.1} parent=0
    _
  %s7 = ssub.s32 1, %s5
  %s8 = scalar_select 0, %s7, %s5
  // Predicated region
  $region2: #{resblock_forward.1} parent=0 // pred_check
    _
  $region3: #{resblock_forward.1} parent=0 // pred_check_branch
    %10 = sbr.rel (0) target = $region5
  $region4: #{resblock_forward.1} parent=0 // pred_region
    _
  $region5: #{resblock_forward.1} parent=0 // pred_fallthru
    _
  // Predicated region
  $region6: #{resblock_forward.1} parent=0 // pred_check
    _
  $region7: #{resblock_forward.1} parent=0 // pred_check_branch
    %12 = sbr.rel (0) target = $region9
  $region8: #{resblock_forward.1} parent=0 // pred_region
    _
  $region9: #{resblock_forward.1} parent=0 // pred_fallthru
    _
  // Predicated region
  $region10: #{resblock_forward.1} parent=0 // pred_check
    _
  $region11: #{resblock_forward.1} parent=0 // pred_check_branch
    %14 = sbr.rel (0) target = $region13
  $region12: #{resblock_forward.1} parent=0 // pred_region
    _
  $region13: #{resblock_forward.1} parent=0 // pred_fallthru
    _
  // Predicated region
  $region14: #{resblock_forward.1} parent=0 // pred_check
    _
  $region15: #{resblock_forward.1} parent=0 // pred_check_branch
    %16 = sbr.rel (0) target = $region17
  $region16: #{resblock_forward.1} parent=0 // pred_region
    _
  $region17: #{resblock_forward.1} parent=0 // pred_fallthru
    _
  %v17 = vld [vmem:[%s0] sm:$0xff]
  %v18 = vld [vmem:[%s0 + $0x8] sm:$0xff]
  %19 = vst [vmem:[#allocation2] sm:$0x1] 0.0
  %20 = vst [vmem:[#allocation2 + $0x11] sm:$0x1] 0.0
  %v21 = vld [vmem:[%s3] sm:$0x1]
  %v22 = vld [vmem:[%s3 + $0x1] sm:$0x1]
  %v23 = vld [vmem:[%s3 + $0x2] sm:$0x1]
  %v24 = vld [vmem:[%s3 + $0x3] sm:$0x1]
  %v25 = vld [vmem:[%s3 + $0x4] sm:$0x1]
  %v26 = vld [vmem:[%s3 + $0x5] sm:$0x1]
  %v27 = vld [vmem:[%s3 + $0x6] sm:$0x1]
  %v28 = vld [vmem:[%s1] sm:$0xff]
  %v29 = vld [vmem:[%s1 + $0x8] sm:$0xff]
  %v30 = vld [vmem:[%s1 + $0x10] sm:$0xff]
  %v31 = vld [vmem:[%s1 + $0x18] sm:$0xff]
  %v32 = vld [vmem:[%s1 + $0x20] sm:$0xff]
  %v33 = vld [vmem:[%s1 + $0x28] sm:$0x1f]
  %v34 = vld [vmem:[%s2] sm:$0xff]
  %v35 = vld [vmem:[%s2 + $0x8] sm:$0xff]
  %v36 = vld [vmem:[%s2 + $0x10] sm:$0xff]
  %v37 = vld [vmem:[%s2 + $0x18] sm:$0xff]
  %v38 = vld [vmem:[%s2 + $0x20] sm:$0xff]
  %v39 = vld [vmem:[%s2 + $0x28] sm:$0x1f]
  %40 = vst [vmem:[#allocation2 + $0x1] sm:$0xff] %v17
  %41 = vst [vmem:[#allocation2 + $0x9] sm:$0xff] %v18
  %v42 = vld [vmem:[#allocation2] sm:$0xff]
  %v43 = vld [vmem:[#allocation2 + $0x8] sm:$0xff]
  %v44 = vld [vmem:[#allocation2 + $0x10] sm:$0x3]
  %45 = vrot.lane.b32.xlu0 %v42, 7
  %v46 = vpop.permute.xlu0 %45
  %47 = vrot.lane.b32.xlu0 %v43, 7
  %v48 = vpop.permute.xlu0 %47
  %49 = vrot.lane.b32.xlu0 %v44, 7
  %v50 = vpop.permute.xlu0 %49
  %v51 = vlaneseq
  %v52 = vshrl.u32 %v51, 7
  %v53 = vsub.s32 0, %v52
  %v54 = vrot.slane %v28, %v53
  %v55 = vmul.f32 %v46, %v54
  %v56 = vmul.f32 %v48, %v54
  %v57 = vadd.f32 %v55, 0.0
  %v58 = vadd.f32 %v56, 0.0
  %v59 = vlaneseq
  %v60 = vshrl.u32 %v59, 7
  %v61 = vsub.s32 1, %v60
  %v62 = vrot.slane %v28, %v61
  %v63 = vmul.f32 %v46, %v62
  %v64 = vmul.f32 %v48, %v62
  %v65 = vmul.f32 %v50, %v62
  %vm69 = vcmask 1046528
  %v70 = vrot.slane %v63, 1
  %v71 = vrot.slane %v64, 1
  %v72 = vsel %vm69, %v70, %v71
  %v73 = vrot.slane %v65, 1
  %v74 = vsel %vm69, %v71, %v73
  %v77 = vadd.f32 %v57, %v72
  %v78 = vadd.f32 %v58, %v74
  %v79 = vlaneseq
  %v80 = vshrl.u32 %v79, 7
  %v81 = vsub.s32 2, %v80
  %v82 = vrot.slane %v28, %v81
  %v83 = vmul.f32 %v46, %v82
  %v84 = vmul.f32 %v48, %v82
  %v85 = vmul.f32 %v50, %v82
  %vm89 = vcmask 1045504
  %v90 = vrot.slane %v83, 2
  %v91 = vrot.slane %v84, 2
  %v92 = vsel %vm89, %v90, %v91
  %v93 = vrot.slane %v85, 2
  %v94 = vsel %vm89, %v91, %v93
  %v97 = vadd.f32 %v77, %v92
  %v98 = vadd.f32 %v78, %v94
  %99 = vrot.lane.b32.xlu0 %v42, 6
  %v100 = vpop.permute.xlu0 %99
  %101 = vrot.lane.b32.xlu0 %v43, 6
  %v102 = vpop.permute.xlu0 %101
  %103 = vrot.lane.b32.xlu0 %v44, 6
  %v104 = vpop.permute.xlu0 %103
  %v105 = vlaneseq
  %v106 = vshrl.u32 %v105, 7
  %v107 = vsub.s32 3, %v106
  %v108 = vrot.slane %v28, %v107
  %v109 = vmul.f32 %v100, %v108
  %v110 = vmul.f32 %v102, %v108
  %v111 = vadd.f32 %v97, %v109
  %v112 = vadd.f32 %v98, %v110
  %v113 = vlaneseq
  %v114 = vshrl.u32 %v113, 7
  %v115 = vsub.s32 4, %v114
  %v116 = vrot.slane %v28, %v115
  %v117 = vmul.f32 %v100, %v116
  %v118 = vmul.f32 %v102, %v116
  %v119 = vmul.f32 %v104, %v116
  %v123 = vrot.slane %v117, 1
  %v124 = vrot.slane %v118, 1
  %v125 = vsel %vm69, %v123, %v124
  %v126 = vrot.slane %v119, 1
  %v127 = vsel %vm69, %v124, %v126
  %v130 = vadd.f32 %v111, %v125
  %v131 = vadd.f32 %v112, %v127
  %v132 = vlaneseq
  %v133 = vshrl.u32 %v132, 7
  %v134 = vsub.s32 5, %v133
  %v135 = vrot.slane %v28, %v134
  %v136 = vmul.f32 %v100, %v135
  %v137 = vmul.f32 %v102, %v135
  %v138 = vmul.f32 %v104, %v135
  %v142 = vrot.slane %v136, 2
  %v143 = vrot.slane %v137, 2
  %v144 = vsel %vm89, %v142, %v143
  %v145 = vrot.slane %v138, 2
  %v146 = vsel %vm89, %v143, %v145
  %v149 = vadd.f32 %v130, %v144
  %v150 = vadd.f32 %v131, %v146
  %151 = vrot.lane.b32.xlu0 %v42, 5
  %v152 = vpop.permute.xlu0 %151
  %153 = vrot.lane.b32.xlu0 %v43, 5
  %v154 = vpop.permute.xlu0 %153
  %155 = vrot.lane.b32.xlu0 %v44, 5
  %v156 = vpop.permute.xlu0 %155
  %v157 = vlaneseq
  %v158 = vshrl.u32 %v157, 7
  %v159 = vsub.s32 6, %v158
  %v160 = vrot.slane %v28, %v159
  %v161 = vmul.f32 %v152, %v160
  %v162 = vmul.f32 %v154, %v160
  %v163 = vadd.f32 %v149, %v161
  %v164 = vadd.f32 %v150, %v162
  %v165 = vlaneseq
  %v166 = vshrl.u32 %v165, 7
  %v167 = vsub.s32 7, %v166
  %v168 = vrot.slane %v28, %v167
  %v169 = vmul.f32 %v152, %v168
  %v170 = vmul.f32 %v154, %v168
  %v171 = vmul.f32 %v156, %v168
  %v175 = vrot.slane %v169, 1
  %v176 = vrot.slane %v170, 1
  %v177 = vsel %vm69, %v175, %v176
  %v178 = vrot.slane %v171, 1
  %v179 = vsel %vm69, %v176, %v178
  %v182 = vadd.f32 %v163, %v177
  %v183 = vadd.f32 %v164, %v179
  %v184 = vlaneseq
  %v185 = vshrl.u32 %v184, 7
  %v186 = vsub.s32 0, %v185
  %v187 = vrot.slane %v29, %v186
  %v188 = vmul.f32 %v152, %v187
  %v189 = vmul.f32 %v154, %v187
  %v190 = vmul.f32 %v156, %v187
  %v194 = vrot.slane %v188, 2
  %v195 = vrot.slane %v189, 2
  %v196 = vsel %vm89, %v194, %v195
  %v197 = vrot.slane %v190, 2
  %v198 = vsel %vm89, %v195, %v197
  %v201 = vadd.f32 %v182, %v196
  %v202 = vadd.f32 %v183, %v198
  %203 = vrot.lane.b32.xlu0 %v42, 4
  %v204 = vpop.permute.xlu0 %203
  %205 = vrot.lane.b32.xlu0 %v43, 4
  %v206 = vpop.permute.xlu0 %205
  %207 = vrot.lane.b32.xlu0 %v44, 4
  %v208 = vpop.permute.xlu0 %207
  %v209 = vlaneseq
  %v210 = vshrl.u32 %v209, 7
  %v211 = vsub.s32 1, %v210
  %v212 = vrot.slane %v29, %v211
  %v213 = vmul.f32 %v204, %v212
  %v214 = vmul.f32 %v206, %v212
  %v215 = vadd.f32 %v201, %v213
  %v216 = vadd.f32 %v202, %v214
  %v217 = vlaneseq
  %v218 = vshrl.u32 %v217, 7
  %v219 = vsub.s32 2, %v218
  %v220 = vrot.slane %v29, %v219
  %v221 = vmul.f32 %v204, %v220
  %v222 = vmul.f32 %v206, %v220
  %v223 = vmul.f32 %v208, %v220
  %v227 = vrot.slane %v221, 1
  %v228 = vrot.slane %v222, 1
  %v229 = vsel %vm69, %v227, %v228
  %v230 = vrot.slane %v223, 1
  %v231 = vsel %vm69, %v228, %v230
  %v234 = vadd.f32 %v215, %v229
  %v235 = vadd.f32 %v216, %v231
  %v236 = vlaneseq
  %v237 = vshrl.u32 %v236, 7
  %v238 = vsub.s32 3, %v237
  %v239 = vrot.slane %v29, %v238
  %v240 = vmul.f32 %v204, %v239
  %v241 = vmul.f32 %v206, %v239
  %v242 = vmul.f32 %v208, %v239
  %v246 = vrot.slane %v240, 2
  %v247 = vrot.slane %v241, 2
  %v248 = vsel %vm89, %v246, %v247
  %v249 = vrot.slane %v242, 2
  %v250 = vsel %vm89, %v247, %v249
  %v253 = vadd.f32 %v234, %v248
  %v254 = vadd.f32 %v235, %v250
  %255 = vrot.lane.b32.xlu0 %v42, 3
  %v256 = vpop.permute.xlu0 %255
  %257 = vrot.lane.b32.xlu0 %v43, 3
  %v258 = vpop.permute.xlu0 %257
  %259 = vrot.lane.b32.xlu0 %v44, 3
  %v260 = vpop.permute.xlu0 %259
  %v261 = vlaneseq
  %v262 = vshrl.u32 %v261, 7
  %v263 = vsub.s32 4, %v262
  %v264 = vrot.slane %v29, %v263
  %v265 = vmul.f32 %v256, %v264
  %v266 = vmul.f32 %v258, %v264
  %v267 = vadd.f32 %v253, %v265
  %v268 = vadd.f32 %v254, %v266
  %v269 = vlaneseq
  %v270 = vshrl.u32 %v269, 7
  %v271 = vsub.s32 5, %v270
  %v272 = vrot.slane %v29, %v271
  %v273 = vmul.f32 %v256, %v272
  %v274 = vmul.f32 %v258, %v272
  %v275 = vmul.f32 %v260, %v272
  %v279 = vrot.slane %v273, 1
  %v280 = vrot.slane %v274, 1
  %v281 = vsel %vm69, %v279, %v280
  %v282 = vrot.slane %v275, 1
  %v283 = vsel %vm69, %v280, %v282
  %v286 = vadd.f32 %v267, %v281
  %v287 = vadd.f32 %v268, %v283
  %v288 = vlaneseq
  %v289 = vshrl.u32 %v288, 7
  %v290 = vsub.s32 6, %v289
  %v291 = vrot.slane %v29, %v290
  %v292 = vmul.f32 %v256, %v291
  %v293 = vmul.f32 %v258, %v291
  %v294 = vmul.f32 %v260, %v291
  %v298 = vrot.slane %v292, 2
  %v299 = vrot.slane %v293, 2
  %v300 = vsel %vm89, %v298, %v299
  %v301 = vrot.slane %v294, 2
  %v302 = vsel %vm89, %v299, %v301
  %v305 = vadd.f32 %v286, %v300
  %v306 = vadd.f32 %v287, %v302
  %307 = vrot.lane.b32.xlu0 %v42, 2
  %v308 = vpop.permute.xlu0 %307
  %309 = vrot.lane.b32.xlu0 %v43, 2
  %v310 = vpop.permute.xlu0 %309
  %311 = vrot.lane.b32.xlu0 %v44, 2
  %v312 = vpop.permute.xlu0 %311
  %v313 = vlaneseq
  %v314 = vshrl.u32 %v313, 7
  %v315 = vsub.s32 7, %v314
  %v316 = vrot.slane %v29, %v315
  %v317 = vmul.f32 %v308, %v316
  %v318 = vmul.f32 %v310, %v316
  %v319 = vadd.f32 %v305, %v317
  %v320 = vadd.f32 %v306, %v318
  %v321 = vlaneseq
  %v322 = vshrl.u32 %v321, 7
  %v323 = vsub.s32 0, %v322
  %v324 = vrot.slane %v30, %v323
  %v325 = vmul.f32 %v308, %v324
  %v326 = vmul.f32 %v310, %v324
  %v327 = vmul.f32 %v312, %v324
  %v331 = vrot.slane %v325, 1
  %v332 = vrot.slane %v326, 1
  %v333 = vsel %vm69, %v331, %v332
  %v334 = vrot.slane %v327, 1
  %v335 = vsel %vm69, %v332, %v334
  %v338 = vadd.f32 %v319, %v333
  %v339 = vadd.f32 %v320, %v335
  %v340 = vlaneseq
  %v341 = vshrl.u32 %v340, 7
  %v342 = vsub.s32 1, %v341
  %v343 = vrot.slane %v30, %v342
  %v344 = vmul.f32 %v308, %v343
  %v345 = vmul.f32 %v310, %v343
  %v346 = vmul.f32 %v312, %v343
  %v350 = vrot.slane %v344, 2
  %v351 = vrot.slane %v345, 2
  %v352 = vsel %vm89, %v350, %v351
  %v353 = vrot.slane %v346, 2
  %v354 = vsel %vm89, %v351, %v353
  %v357 = vadd.f32 %v338, %v352
  %v358 = vadd.f32 %v339, %v354
  %359 = vrot.lane.b32.xlu0 %v42, 1
  %v360 = vpop.permute.xlu0 %359
  %361 = vrot.lane.b32.xlu0 %v43, 1
  %v362 = vpop.permute.xlu0 %361
  %363 = vrot.lane.b32.xlu0 %v44, 1
  %v364 = vpop.permute.xlu0 %363
  %v365 = vlaneseq
  %v366 = vshrl.u32 %v365, 7
  %v367 = vsub.s32 2, %v366
  %v368 = vrot.slane %v30, %v367
  %v369 = vmul.f32 %v360, %v368
  %v370 = vmul.f32 %v362, %v368
  %v371 = vadd.f32 %v357, %v369
  %v372 = vadd.f32 %v358, %v370
  %v373 = vlaneseq
  %v374 = vshrl.u32 %v373, 7
  %v375 = vsub.s32 3, %v374
  %v376 = vrot.slane %v30, %v375
  %v377 = vmul.f32 %v360, %v376
  %v378 = vmul.f32 %v362, %v376
  %v379 = vmul.f32 %v364, %v376
  %v383 = vrot.slane %v377, 1
  %v384 = vrot.slane %v378, 1
  %v385 = vsel %vm69, %v383, %v384
  %v386 = vrot.slane %v379, 1
  %v387 = vsel %vm69, %v384, %v386
  %v390 = vadd.f32 %v371, %v385
  %v391 = vadd.f32 %v372, %v387
  %v392 = vlaneseq
  %v393 = vshrl.u32 %v392, 7
  %v394 = vsub.s32 4, %v393
  %v395 = vrot.slane %v30, %v394
  %v396 = vmul.f32 %v360, %v395
  %v397 = vmul.f32 %v362, %v395
  %v398 = vmul.f32 %v364, %v395
  %v402 = vrot.slane %v396, 2
  %v403 = vrot.slane %v397, 2
  %v404 = vsel %vm89, %v402, %v403
  %v405 = vrot.slane %v398, 2
  %v406 = vsel %vm89, %v403, %v405
  %v409 = vadd.f32 %v390, %v404
  %v410 = vadd.f32 %v391, %v406
  %v411 = vlaneseq
  %v412 = vshrl.u32 %v411, 7
  %v413 = vsub.s32 5, %v412
  %v414 = vrot.slane %v30, %v413
  %v415 = vmul.f32 %v42, %v414
  %v416 = vmul.f32 %v43, %v414
  %v417 = vadd.f32 %v409, %v415
  %v418 = vadd.f32 %v410, %v416
  %v419 = vlaneseq
  %v420 = vshrl.u32 %v419, 7
  %v421 = vsub.s32 6, %v420
  %v422 = vrot.slane %v30, %v421
  %v423 = vmul.f32 %v42, %v422
  %v424 = vmul.f32 %v43, %v422
  %v425 = vmul.f32 %v44, %v422
  %v429 = vrot.slane %v423, 1
  %v430 = vrot.slane %v424, 1
  %v431 = vsel %vm69, %v429, %v430
  %v432 = vrot.slane %v425, 1
  %v433 = vsel %vm69, %v430, %v432
  %v436 = vadd.f32 %v417, %v431
  %v437 = vadd.f32 %v418, %v433
  %v438 = vlaneseq
  %v439 = vshrl.u32 %v438, 7
  %v440 = vsub.s32 7, %v439
  %v441 = vrot.slane %v30, %v440
  %v442 = vmul.f32 %v42, %v441
  %v443 = vmul.f32 %v43, %v441
  %v444 = vmul.f32 %v44, %v441
  %v448 = vrot.slane %v442, 2
  %v449 = vrot.slane %v443, 2
  %v450 = vsel %vm89, %v448, %v449
  %v451 = vrot.slane %v444, 2
  %v452 = vsel %vm89, %v449, %v451
  %v455 = vadd.f32 %v436, %v450
  %v456 = vadd.f32 %v437, %v452
  %457 = vrot.lane.b32.xlu0 %v42, 127
  %v458 = vpop.permute.xlu0 %457
  %459 = vrot.lane.b32.xlu0 %v43, 127
  %v460 = vpop.permute.xlu0 %459
  %461 = vrot.lane.b32.xlu0 %v44, 127
  %v462 = vpop.permute.xlu0 %461
  %v463 = vlaneseq
  %v464 = vshrl.u32 %v463, 7
  %v465 = vsub.s32 0, %v464
  %v466 = vrot.slane %v31, %v465
  %v467 = vmul.f32 %v458, %v466
  %v468 = vmul.f32 %v460, %v466
  %v469 = vadd.f32 %v455, %v467
  %v470 = vadd.f32 %v456, %v468
  %v471 = vlaneseq
  %v472 = vshrl.u32 %v471, 7
  %v473 = vsub.s32 1, %v472
  %v474 = vrot.slane %v31, %v473
  %v475 = vmul.f32 %v458, %v474
  %v476 = vmul.f32 %v460, %v474
  %v477 = vmul.f32 %v462, %v474
  %v481 = vrot.slane %v475, 1
  %v482 = vrot.slane %v476, 1
  %v483 = vsel %vm69, %v481, %v482
  %v484 = vrot.slane %v477, 1
  %v485 = vsel %vm69, %v482, %v484
  %v488 = vadd.f32 %v469, %v483
  %v489 = vadd.f32 %v470, %v485
  %v490 = vlaneseq
  %v491 = vshrl.u32 %v490, 7
  %v492 = vsub.s32 2, %v491
  %v493 = vrot.slane %v31, %v492
  %v494 = vmul.f32 %v458, %v493
  %v495 = vmul.f32 %v460, %v493
  %v496 = vmul.f32 %v462, %v493
  %v500 = vrot.slane %v494, 2
  %v501 = vrot.slane %v495, 2
  %v502 = vsel %vm89, %v500, %v501
  %v503 = vrot.slane %v496, 2
  %v504 = vsel %vm89, %v501, %v503
  %v507 = vadd.f32 %v488, %v502
  %v508 = vadd.f32 %v489, %v504
  %509 = vrot.lane.b32.xlu0 %v42, 126
  %v510 = vpop.permute.xlu0 %509
  %511 = vrot.lane.b32.xlu0 %v43, 126
  %v512 = vpop.permute.xlu0 %511
  %513 = vrot.lane.b32.xlu0 %v44, 126
  %v514 = vpop.permute.xlu0 %513
  %v515 = vlaneseq
  %v516 = vshrl.u32 %v515, 7
  %v517 = vsub.s32 3, %v516
  %v518 = vrot.slane %v31, %v517
  %v519 = vmul.f32 %v510, %v518
  %v520 = vmul.f32 %v512, %v518
  %v521 = vadd.f32 %v507, %v519
  %v522 = vadd.f32 %v508, %v520
  %v523 = vlaneseq
  %v524 = vshrl.u32 %v523, 7
  %v525 = vsub.s32 4, %v524
  %v526 = vrot.slane %v31, %v525
  %v527 = vmul.f32 %v510, %v526
  %v528 = vmul.f32 %v512, %v526
  %v529 = vmul.f32 %v514, %v526
  %v533 = vrot.slane %v527, 1
  %v534 = vrot.slane %v528, 1
  %v535 = vsel %vm69, %v533, %v534
  %v536 = vrot.slane %v529, 1
  %v537 = vsel %vm69, %v534, %v536
  %v540 = vadd.f32 %v521, %v535
  %v541 = vadd.f32 %v522, %v537
  %v542 = vlaneseq
  %v543 = vshrl.u32 %v542, 7
  %v544 = vsub.s32 5, %v543
  %v545 = vrot.slane %v31, %v544
  %v546 = vmul.f32 %v510, %v545
  %v547 = vmul.f32 %v512, %v545
  %v548 = vmul.f32 %v514, %v545
  %v552 = vrot.slane %v546, 2
  %v553 = vrot.slane %v547, 2
  %v554 = vsel %vm89, %v552, %v553
  %v555 = vrot.slane %v548, 2
  %v556 = vsel %vm89, %v553, %v555
  %v559 = vadd.f32 %v540, %v554
  %v560 = vadd.f32 %v541, %v556
  %561 = vrot.lane.b32.xlu0 %v42, 125
  %v562 = vpop.permute.xlu0 %561
  %563 = vrot.lane.b32.xlu0 %v43, 125
  %v564 = vpop.permute.xlu0 %563
  %565 = vrot.lane.b32.xlu0 %v44, 125
  %v566 = vpop.permute.xlu0 %565
  %v567 = vlaneseq
  %v568 = vshrl.u32 %v567, 7
  %v569 = vsub.s32 6, %v568
  %v570 = vrot.slane %v31, %v569
  %v571 = vmul.f32 %v562, %v570
  %v572 = vmul.f32 %v564, %v570
  %v573 = vadd.f32 %v559, %v571
  %v574 = vadd.f32 %v560, %v572
  %v575 = vlaneseq
  %v576 = vshrl.u32 %v575, 7
  %v577 = vsub.s32 7, %v576
  %v578 = vrot.slane %v31, %v577
  %v579 = vmul.f32 %v562, %v578
  %v580 = vmul.f32 %v564, %v578
  %v581 = vmul.f32 %v566, %v578
  %v585 = vrot.slane %v579, 1
  %v586 = vrot.slane %v580, 1
  %v587 = vsel %vm69, %v585, %v586
  %v588 = vrot.slane %v581, 1
  %v589 = vsel %vm69, %v586, %v588
  %v592 = vadd.f32 %v573, %v587
  %v593 = vadd.f32 %v574, %v589
  %v594 = vlaneseq
  %v595 = vshrl.u32 %v594, 7
  %v596 = vsub.s32 0, %v595
  %v597 = vrot.slane %v32, %v596
  %v598 = vmul.f32 %v562, %v597
  %v599 = vmul.f32 %v564, %v597
  %v600 = vmul.f32 %v566, %v597
  %v604 = vrot.slane %v598, 2
  %v605 = vrot.slane %v599, 2
  %v606 = vsel %vm89, %v604, %v605
  %v607 = vrot.slane %v600, 2
  %v608 = vsel %vm89, %v605, %v607
  %v611 = vadd.f32 %v592, %v606
  %v612 = vadd.f32 %v593, %v608
  %613 = vrot.lane.b32.xlu0 %v42, 124
  %v614 = vpop.permute.xlu0 %613
  %615 = vrot.lane.b32.xlu0 %v43, 124
  %v616 = vpop.permute.xlu0 %615
  %617 = vrot.lane.b32.xlu0 %v44, 124
  %v618 = vpop.permute.xlu0 %617
  %v619 = vlaneseq
  %v620 = vshrl.u32 %v619, 7
  %v621 = vsub.s32 1, %v620
  %v622 = vrot.slane %v32, %v621
  %v623 = vmul.f32 %v614, %v622
  %v624 = vmul.f32 %v616, %v622
  %v625 = vadd.f32 %v611, %v623
  %v626 = vadd.f32 %v612, %v624
  %v627 = vlaneseq
  %v628 = vshrl.u32 %v627, 7
  %v629 = vsub.s32 2, %v628
  %v630 = vrot.slane %v32, %v629
  %v631 = vmul.f32 %v614, %v630
  %v632 = vmul.f32 %v616, %v630
  %v633 = vmul.f32 %v618, %v630
  %v637 = vrot.slane %v631, 1
  %v638 = vrot.slane %v632, 1
  %v639 = vsel %vm69, %v637, %v638
  %v640 = vrot.slane %v633, 1
  %v641 = vsel %vm69, %v638, %v640
  %v644 = vadd.f32 %v625, %v639
  %v645 = vadd.f32 %v626, %v641
  %v646 = vlaneseq
  %v647 = vshrl.u32 %v646, 7
  %v648 = vsub.s32 3, %v647
  %v649 = vrot.slane %v32, %v648
  %v650 = vmul.f32 %v614, %v649
  %v651 = vmul.f32 %v616, %v649
  %v652 = vmul.f32 %v618, %v649
  %v656 = vrot.slane %v650, 2
  %v657 = vrot.slane %v651, 2
  %v658 = vsel %vm89, %v656, %v657
  %v659 = vrot.slane %v652, 2
  %v660 = vsel %vm89, %v657, %v659
  %v663 = vadd.f32 %v644, %v658
  %v664 = vadd.f32 %v645, %v660
  %665 = vrot.lane.b32.xlu0 %v42, 123
  %v666 = vpop.permute.xlu0 %665
  %667 = vrot.lane.b32.xlu0 %v43, 123
  %v668 = vpop.permute.xlu0 %667
  %669 = vrot.lane.b32.xlu0 %v44, 123
  %v670 = vpop.permute.xlu0 %669
  %v671 = vlaneseq
  %v672 = vshrl.u32 %v671, 7
  %v673 = vsub.s32 4, %v672
  %v674 = vrot.slane %v32, %v673
  %v675 = vmul.f32 %v666, %v674
  %v676 = vmul.f32 %v668, %v674
  %v677 = vadd.f32 %v663, %v675
  %v678 = vadd.f32 %v664, %v676
  %v679 = vlaneseq
  %v680 = vshrl.u32 %v679, 7
  %v681 = vsub.s32 5, %v680
  %v682 = vrot.slane %v32, %v681
  %v683 = vmul.f32 %v666, %v682
  %v684 = vmul.f32 %v668, %v682
  %v685 = vmul.f32 %v670, %v682
  %v689 = vrot.slane %v683, 1
  %v690 = vrot.slane %v684, 1
  %v691 = vsel %vm69, %v689, %v690
  %v692 = vrot.slane %v685, 1
  %v693 = vsel %vm69, %v690, %v692
  %v696 = vadd.f32 %v677, %v691
  %v697 = vadd.f32 %v678, %v693
  %v698 = vlaneseq
  %v699 = vshrl.u32 %v698, 7
  %v700 = vsub.s32 6, %v699
  %v701 = vrot.slane %v32, %v700
  %v702 = vmul.f32 %v666, %v701
  %v703 = vmul.f32 %v668, %v701
  %v704 = vmul.f32 %v670, %v701
  %v708 = vrot.slane %v702, 2
  %v709 = vrot.slane %v703, 2
  %v710 = vsel %vm89, %v708, %v709
  %v711 = vrot.slane %v704, 2
  %v712 = vsel %vm89, %v709, %v711
  %v715 = vadd.f32 %v696, %v710
  %v716 = vadd.f32 %v697, %v712
  %717 = vrot.lane.b32.xlu0 %v42, 122
  %v718 = vpop.permute.xlu0 %717
  %719 = vrot.lane.b32.xlu0 %v43, 122
  %v720 = vpop.permute.xlu0 %719
  %721 = vrot.lane.b32.xlu0 %v44, 122
  %v722 = vpop.permute.xlu0 %721
  %v723 = vlaneseq
  %v724 = vshrl.u32 %v723, 7
  %v725 = vsub.s32 7, %v724
  %v726 = vrot.slane %v32, %v725
  %v727 = vmul.f32 %v718, %v726
  %v728 = vmul.f32 %v720, %v726
  %v729 = vadd.f32 %v715, %v727
  %v730 = vadd.f32 %v716, %v728
  %v731 = vlaneseq
  %v732 = vshrl.u32 %v731, 7
  %v733 = vsub.s32 0, %v732
  %v734 = vrot.slane %v33, %v733
  %v735 = vmul.f32 %v718, %v734
  %v736 = vmul.f32 %v720, %v734
  %v737 = vmul.f32 %v722, %v734
  %v741 = vrot.slane %v735, 1
  %v742 = vrot.slane %v736, 1
  %v743 = vsel %vm69, %v741, %v742
  %v744 = vrot.slane %v737, 1
  %v745 = vsel %vm69, %v742, %v744
  %v748 = vadd.f32 %v729, %v743
  %v749 = vadd.f32 %v730, %v745
  %v750 = vlaneseq
  %v751 = vshrl.u32 %v750, 7
  %v752 = vsub.s32 1, %v751
  %v753 = vrot.slane %v33, %v752
  %v754 = vmul.f32 %v718, %v753
  %v755 = vmul.f32 %v720, %v753
  %v756 = vmul.f32 %v722, %v753
  %v760 = vrot.slane %v754, 2
  %v761 = vrot.slane %v755, 2
  %v762 = vsel %vm89, %v760, %v761
  %v763 = vrot.slane %v756, 2
  %v764 = vsel %vm89, %v761, %v763
  %v767 = vadd.f32 %v748, %v762
  %v768 = vadd.f32 %v749, %v764
  %769 = vrot.lane.b32.xlu0 %v42, 121
  %v770 = vpop.permute.xlu0 %769
  %771 = vrot.lane.b32.xlu0 %v43, 121
  %v772 = vpop.permute.xlu0 %771
  %773 = vrot.lane.b32.xlu0 %v44, 121
  %v774 = vpop.permute.xlu0 %773
  %v775 = vlaneseq
  %v776 = vshrl.u32 %v775, 7
  %v777 = vsub.s32 2, %v776
  %v778 = vrot.slane %v33, %v777
  %v779 = vmul.f32 %v770, %v778
  %v780 = vmul.f32 %v772, %v778
  %v781 = vadd.f32 %v767, %v779
  %v782 = vadd.f32 %v768, %v780
  %v783 = vlaneseq
  %v784 = vshrl.u32 %v783, 7
  %v785 = vsub.s32 3, %v784
  %v786 = vrot.slane %v33, %v785
  %v787 = vmul.f32 %v770, %v786
  %v788 = vmul.f32 %v772, %v786
  %v789 = vmul.f32 %v774, %v786
  %v793 = vrot.slane %v787, 1
  %v794 = vrot.slane %v788, 1
  %v795 = vsel %vm69, %v793, %v794
  %v796 = vrot.slane %v789, 1
  %v797 = vsel %vm69, %v794, %v796
  %v800 = vadd.f32 %v781, %v795
  %v801 = vadd.f32 %v782, %v797
  %v802 = vlaneseq
  %v803 = vshrl.u32 %v802, 7
  %v804 = vsub.s32 4, %v803
  %v805 = vrot.slane %v33, %v804
  %v806 = vmul.f32 %v770, %v805
  %v807 = vmul.f32 %v772, %v805
  %v808 = vmul.f32 %v774, %v805
  %v812 = vrot.slane %v806, 2
  %v813 = vrot.slane %v807, 2
  %v814 = vsel %vm89, %v812, %v813
  %v815 = vrot.slane %v808, 2
  %v816 = vsel %vm89, %v813, %v815
  %v819 = vadd.f32 %v800, %v814
  %v820 = vadd.f32 %v801, %v816
  %v821 = vlaneseq
  %v822 = vshrl.u32 %v821, 7
  %v823 = vsub.s32 0, %v822
  %v824 = vrot.slane %v21, %v823
  %v825 = vadd.f32 %v819, %v824
  %v826 = vadd.f32 %v820, %v824
  %v827 = vadd.f32 %v825, %v826
  %v828 = vrot.slane %v827, 4
  %v829 = vadd.f32 %v827, %v828
  %v830 = vrot.slane %v829, 2
  %v831 = vadd.f32 %v829, %v830
  %v832 = vrot.slane %v831, 1
  %v833 = vadd.f32 %v831, %v832
  %834 = vrot.lane.b32.xlu0 %v833, 4
  %v835 = vpop.permute.xlu0 %834
  %v836 = vadd.f32 %v833, %v835
  %837 = vrot.lane.b32.xlu0 %v836, 8
  %v838 = vpop.permute.xlu0 %837
  %v839 = vadd.f32 %v836, %v838
  %840 = vrot.lane.b32.xlu0 %v839, 16
  %v841 = vpop.permute.xlu0 %840
  %v842 = vadd.f32 %v839, %v841
  %843 = vrot.lane.b32.xlu0 %v842, 32
  %v844 = vpop.permute.xlu0 %843
  %v845 = vadd.f32 %v842, %v844
  %846 = vrot.lane.b32.xlu0 %v845, 64
  %v847 = vpop.permute.xlu0 %846
  %v848 = vadd.f32 %v845, %v847
  %v849 = vmul.f32 %v825, %v825
  %v850 = vmul.f32 %v826, %v826
  %v851 = vadd.f32 %v849, %v850
  %v852 = vrot.slane %v851, 4
  %v853 = vadd.f32 %v851, %v852
  %v854 = vrot.slane %v853, 2
  %v855 = vadd.f32 %v853, %v854
  %v856 = vrot.slane %v855, 1
  %v857 = vadd.f32 %v855, %v856
  %858 = vrot.lane.b32.xlu0 %v857, 4
  %v859 = vpop.permute.xlu0 %858
  %v860 = vadd.f32 %v857, %v859
  %861 = vrot.lane.b32.xlu0 %v860, 8
  %v862 = vpop.permute.xlu0 %861
  %v863 = vadd.f32 %v860, %v862
  %864 = vrot.lane.b32.xlu0 %v863, 16
  %v865 = vpop.permute.xlu0 %864
  %v866 = vadd.f32 %v863, %v865
  %867 = vrot.lane.b32.xlu0 %v866, 32
  %v868 = vpop.permute.xlu0 %867
  %v869 = vadd.f32 %v866, %v868
  %870 = vrot.lane.b32.xlu0 %v869, 64
  %v871 = vpop.permute.xlu0 %870
  %v872 = vadd.f32 %v869, %v871
  %v873 = vmul.f32 %v848, 0.001953125
  %v874 = vmul.f32 %v872, 0.001953125
  %v875 = vmul.f32 %v873, %v873
  %v876 = vsub.f32 %v874, %v875
  %v877 = vadd.f32 %v876, 1e-05
  %v878 = vrsqrt.pop %v877
  %v879 = vmul.f32 %v22, %v878
  %v880 = vmul.f32 %v873, %v879
  %v881 = vsub.f32 %v23, %v880
  %v882 = vlaneseq
  %v883 = vshrl.u32 %v882, 7
  %v884 = vsub.s32 0, %v883
  %v885 = vrot.slane %v879, %v884
  %v886 = vmul.f32 %v825, %v885
  %v887 = vmul.f32 %v826, %v885
  %v888 = vlaneseq
  %v889 = vshrl.u32 %v888, 7
  %v890 = vsub.s32 0, %v889
  %v891 = vrot.slane %v881, %v890
  %v892 = vadd.f32 %v886, %v891
  %v893 = vadd.f32 %v887, %v891
  %v894 = vmax.f32 %v892, 0.0
  %v895 = vmax.f32 %v893, 0.0
  %v896 = vmin.f32 %v892, 0.0
  %v897 = vmin.f32 %v893, 0.0
  %v898 = vlaneseq
  %v899 = vshrl.u32 %v898, 7
  %v900 = vsub.s32 0, %v899
  %v901 = vrot.slane %v27, %v900
  %v902 = vmul.f32 %v901, %v896
  %v903 = vmul.f32 %v901, %v897
  %v904 = vadd.f32 %v894, %v902
  %v905 = vadd.f32 %v895, %v903
  %906 = vst [vmem:[#allocation2 + $0x1] sm:$0xff] %v904
  %907 = vst [vmem:[#allocation2 + $0x9] sm:$0xff] %v905
  %v908 = vld [vmem:[#allocation2] sm:$0xff]
  %v909 = vld [vmem:[#allocation2 + $0x8] sm:$0xff]
  %v910 = vld [vmem:[#allocation2 + $0x10] sm:$0x3]
  %911 = vrot.lane.b32.xlu0 %v908, 7
  %v912 = vpop.permute.xlu0 %911
  %913 = vrot.lane.b32.xlu0 %v909, 7
  %v914 = vpop.permute.xlu0 %913
  %915 = vrot.lane.b32.xlu0 %v910, 7
  %v916 = vpop.permute.xlu0 %915
  %v917 = vlaneseq
  %v918 = vshrl.u32 %v917, 7
  %v919 = vsub.s32 0, %v918
  %v920 = vrot.slane %v34, %v919
  %v921 = vmul.f32 %v912, %v920
  %v922 = vmul.f32 %v914, %v920
  %v923 = vadd.f32 %v921, 0.0
  %v924 = vadd.f32 %v922, 0.0
  %v925 = vlaneseq
  %v926 = vshrl.u32 %v925, 7
  %v927 = vsub.s32 1, %v926
  %v928 = vrot.slane %v34, %v927
  %v929 = vmul.f32 %v912, %v928
  %v930 = vmul.f32 %v914, %v928
  %v931 = vmul.f32 %v916, %v928
  %v935 = vrot.slane %v929, 1
  %v936 = vrot.slane %v930, 1
  %v937 = vsel %vm69, %v935, %v936
  %v938 = vrot.slane %v931, 1
  %v939 = vsel %vm69, %v936, %v938
  %v942 = vadd.f32 %v923, %v937
  %v943 = vadd.f32 %v924, %v939
  %v944 = vlaneseq
  %v945 = vshrl.u32 %v944, 7
  %v946 = vsub.s32 2, %v945
  %v947 = vrot.slane %v34, %v946
  %v948 = vmul.f32 %v912, %v947
  %v949 = vmul.f32 %v914, %v947
  %v950 = vmul.f32 %v916, %v947
  %v954 = vrot.slane %v948, 2
  %v955 = vrot.slane %v949, 2
  %v956 = vsel %vm89, %v954, %v955
  %v957 = vrot.slane %v950, 2
  %v958 = vsel %vm89, %v955, %v957
  %v961 = vadd.f32 %v942, %v956
  %v962 = vadd.f32 %v943, %v958
  %963 = vrot.lane.b32.xlu0 %v908, 6
  %v964 = vpop.permute.xlu0 %963
  %965 = vrot.lane.b32.xlu0 %v909, 6
  %v966 = vpop.permute.xlu0 %965
  %967 = vrot.lane.b32.xlu0 %v910, 6
  %v968 = vpop.permute.xlu0 %967
  %v969 = vlaneseq
  %v970 = vshrl.u32 %v969, 7
  %v971 = vsub.s32 3, %v970
  %v972 = vrot.slane %v34, %v971
  %v973 = vmul.f32 %v964, %v972
  %v974 = vmul.f32 %v966, %v972
  %v975 = vadd.f32 %v961, %v973
  %v976 = vadd.f32 %v962, %v974
  %v977 = vlaneseq
  %v978 = vshrl.u32 %v977, 7
  %v979 = vsub.s32 4, %v978
  %v980 = vrot.slane %v34, %v979
  %v981 = vmul.f32 %v964, %v980
  %v982 = vmul.f32 %v966, %v980
  %v983 = vmul.f32 %v968, %v980
  %v987 = vrot.slane %v981, 1
  %v988 = vrot.slane %v982, 1
  %v989 = vsel %vm69, %v987, %v988
  %v990 = vrot.slane %v983, 1
  %v991 = vsel %vm69, %v988, %v990
  %v994 = vadd.f32 %v975, %v989
  %v995 = vadd.f32 %v976, %v991
  %v996 = vlaneseq
  %v997 = vshrl.u32 %v996, 7
  %v998 = vsub.s32 5, %v997
  %v999 = vrot.slane %v34, %v998
  %v1000 = vmul.f32 %v964, %v999
  %v1001 = vmul.f32 %v966, %v999
  %v1002 = vmul.f32 %v968, %v999
  %v1006 = vrot.slane %v1000, 2
  %v1007 = vrot.slane %v1001, 2
  %v1008 = vsel %vm89, %v1006, %v1007
  %v1009 = vrot.slane %v1002, 2
  %v1010 = vsel %vm89, %v1007, %v1009
  %v1013 = vadd.f32 %v994, %v1008
  %v1014 = vadd.f32 %v995, %v1010
  %1015 = vrot.lane.b32.xlu0 %v908, 5
  %v1016 = vpop.permute.xlu0 %1015
  %1017 = vrot.lane.b32.xlu0 %v909, 5
  %v1018 = vpop.permute.xlu0 %1017
  %1019 = vrot.lane.b32.xlu0 %v910, 5
  %v1020 = vpop.permute.xlu0 %1019
  %v1021 = vlaneseq
  %v1022 = vshrl.u32 %v1021, 7
  %v1023 = vsub.s32 6, %v1022
  %v1024 = vrot.slane %v34, %v1023
  %v1025 = vmul.f32 %v1016, %v1024
  %v1026 = vmul.f32 %v1018, %v1024
  %v1027 = vadd.f32 %v1013, %v1025
  %v1028 = vadd.f32 %v1014, %v1026
  %v1029 = vlaneseq
  %v1030 = vshrl.u32 %v1029, 7
  %v1031 = vsub.s32 7, %v1030
  %v1032 = vrot.slane %v34, %v1031
  %v1033 = vmul.f32 %v1016, %v1032
  %v1034 = vmul.f32 %v1018, %v1032
  %v1035 = vmul.f32 %v1020, %v1032
  %v1039 = vrot.slane %v1033, 1
  %v1040 = vrot.slane %v1034, 1
  %v1041 = vsel %vm69, %v1039, %v1040
  %v1042 = vrot.slane %v1035, 1
  %v1043 = vsel %vm69, %v1040, %v1042
  %v1046 = vadd.f32 %v1027, %v1041
  %v1047 = vadd.f32 %v1028, %v1043
  %v1048 = vlaneseq
  %v1049 = vshrl.u32 %v1048, 7
  %v1050 = vsub.s32 0, %v1049
  %v1051 = vrot.slane %v35, %v1050
  %v1052 = vmul.f32 %v1016, %v1051
  %v1053 = vmul.f32 %v1018, %v1051
  %v1054 = vmul.f32 %v1020, %v1051
  %v1058 = vrot.slane %v1052, 2
  %v1059 = vrot.slane %v1053, 2
  %v1060 = vsel %vm89, %v1058, %v1059
  %v1061 = vrot.slane %v1054, 2
  %v1062 = vsel %vm89, %v1059, %v1061
  %v1065 = vadd.f32 %v1046, %v1060
  %v1066 = vadd.f32 %v1047, %v1062
  %1067 = vrot.lane.b32.xlu0 %v908, 4
  %v1068 = vpop.permute.xlu0 %1067
  %1069 = vrot.lane.b32.xlu0 %v909, 4
  %v1070 = vpop.permute.xlu0 %1069
  %1071 = vrot.lane.b32.xlu0 %v910, 4
  %v1072 = vpop.permute.xlu0 %1071
  %v1073 = vlaneseq
  %v1074 = vshrl.u32 %v1073, 7
  %v1075 = vsub.s32 1, %v1074
  %v1076 = vrot.slane %v35, %v1075
  %v1077 = vmul.f32 %v1068, %v1076
  %v1078 = vmul.f32 %v1070, %v1076
  %v1079 = vadd.f32 %v1065, %v1077
  %v1080 = vadd.f32 %v1066, %v1078
  %v1081 = vlaneseq
  %v1082 = vshrl.u32 %v1081, 7
  %v1083 = vsub.s32 2, %v1082
  %v1084 = vrot.slane %v35, %v1083
  %v1085 = vmul.f32 %v1068, %v1084
  %v1086 = vmul.f32 %v1070, %v1084
  %v1087 = vmul.f32 %v1072, %v1084
  %v1091 = vrot.slane %v1085, 1
  %v1092 = vrot.slane %v1086, 1
  %v1093 = vsel %vm69, %v1091, %v1092
  %v1094 = vrot.slane %v1087, 1
  %v1095 = vsel %vm69, %v1092, %v1094
  %v1098 = vadd.f32 %v1079, %v1093
  %v1099 = vadd.f32 %v1080, %v1095
  %v1100 = vlaneseq
  %v1101 = vshrl.u32 %v1100, 7
  %v1102 = vsub.s32 3, %v1101
  %v1103 = vrot.slane %v35, %v1102
  %v1104 = vmul.f32 %v1068, %v1103
  %v1105 = vmul.f32 %v1070, %v1103
  %v1106 = vmul.f32 %v1072, %v1103
  %v1110 = vrot.slane %v1104, 2
  %v1111 = vrot.slane %v1105, 2
  %v1112 = vsel %vm89, %v1110, %v1111
  %v1113 = vrot.slane %v1106, 2
  %v1114 = vsel %vm89, %v1111, %v1113
  %v1117 = vadd.f32 %v1098, %v1112
  %v1118 = vadd.f32 %v1099, %v1114
  %1119 = vrot.lane.b32.xlu0 %v908, 3
  %v1120 = vpop.permute.xlu0 %1119
  %1121 = vrot.lane.b32.xlu0 %v909, 3
  %v1122 = vpop.permute.xlu0 %1121
  %1123 = vrot.lane.b32.xlu0 %v910, 3
  %v1124 = vpop.permute.xlu0 %1123
  %v1125 = vlaneseq
  %v1126 = vshrl.u32 %v1125, 7
  %v1127 = vsub.s32 4, %v1126
  %v1128 = vrot.slane %v35, %v1127
  %v1129 = vmul.f32 %v1120, %v1128
  %v1130 = vmul.f32 %v1122, %v1128
  %v1131 = vadd.f32 %v1117, %v1129
  %v1132 = vadd.f32 %v1118, %v1130
  %v1133 = vlaneseq
  %v1134 = vshrl.u32 %v1133, 7
  %v1135 = vsub.s32 5, %v1134
  %v1136 = vrot.slane %v35, %v1135
  %v1137 = vmul.f32 %v1120, %v1136
  %v1138 = vmul.f32 %v1122, %v1136
  %v1139 = vmul.f32 %v1124, %v1136
  %v1143 = vrot.slane %v1137, 1
  %v1144 = vrot.slane %v1138, 1
  %v1145 = vsel %vm69, %v1143, %v1144
  %v1146 = vrot.slane %v1139, 1
  %v1147 = vsel %vm69, %v1144, %v1146
  %v1150 = vadd.f32 %v1131, %v1145
  %v1151 = vadd.f32 %v1132, %v1147
  %v1152 = vlaneseq
  %v1153 = vshrl.u32 %v1152, 7
  %v1154 = vsub.s32 6, %v1153
  %v1155 = vrot.slane %v35, %v1154
  %v1156 = vmul.f32 %v1120, %v1155
  %v1157 = vmul.f32 %v1122, %v1155
  %v1158 = vmul.f32 %v1124, %v1155
  %v1162 = vrot.slane %v1156, 2
  %v1163 = vrot.slane %v1157, 2
  %v1164 = vsel %vm89, %v1162, %v1163
  %v1165 = vrot.slane %v1158, 2
  %v1166 = vsel %vm89, %v1163, %v1165
  %v1169 = vadd.f32 %v1150, %v1164
  %v1170 = vadd.f32 %v1151, %v1166
  %1171 = vrot.lane.b32.xlu0 %v908, 2
  %v1172 = vpop.permute.xlu0 %1171
  %1173 = vrot.lane.b32.xlu0 %v909, 2
  %v1174 = vpop.permute.xlu0 %1173
  %1175 = vrot.lane.b32.xlu0 %v910, 2
  %v1176 = vpop.permute.xlu0 %1175
  %v1177 = vlaneseq
  %v1178 = vshrl.u32 %v1177, 7
  %v1179 = vsub.s32 7, %v1178
  %v1180 = vrot.slane %v35, %v1179
  %v1181 = vmul.f32 %v1172, %v1180
  %v1182 = vmul.f32 %v1174, %v1180
  %v1183 = vadd.f32 %v1169, %v1181
  %v1184 = vadd.f32 %v1170, %v1182
  %v1185 = vlaneseq
  %v1186 = vshrl.u32 %v1185, 7
  %v1187 = vsub.s32 0, %v1186
  %v1188 = vrot.slane %v36, %v1187
  %v1189 = vmul.f32 %v1172, %v1188
  %v1190 = vmul.f32 %v1174, %v1188
  %v1191 = vmul.f32 %v1176, %v1188
  %v1195 = vrot.slane %v1189, 1
  %v1196 = vrot.slane %v1190, 1
  %v1197 = vsel %vm69, %v1195, %v1196
  %v1198 = vrot.slane %v1191, 1
  %v1199 = vsel %vm69, %v1196, %v1198
  %v1202 = vadd.f32 %v1183, %v1197
  %v1203 = vadd.f32 %v1184, %v1199
  %v1204 = vlaneseq
  %v1205 = vshrl.u32 %v1204, 7
  %v1206 = vsub.s32 1, %v1205
  %v1207 = vrot.slane %v36, %v1206
  %v1208 = vmul.f32 %v1172, %v1207
  %v1209 = vmul.f32 %v1174, %v1207
  %v1210 = vmul.f32 %v1176, %v1207
  %v1214 = vrot.slane %v1208, 2
  %v1215 = vrot.slane %v1209, 2
  %v1216 = vsel %vm89, %v1214, %v1215
  %v1217 = vrot.slane %v1210, 2
  %v1218 = vsel %vm89, %v1215, %v1217
  %v1221 = vadd.f32 %v1202, %v1216
  %v1222 = vadd.f32 %v1203, %v1218
  %1223 = vrot.lane.b32.xlu0 %v908, 1
  %v1224 = vpop.permute.xlu0 %1223
  %1225 = vrot.lane.b32.xlu0 %v909, 1
  %v1226 = vpop.permute.xlu0 %1225
  %1227 = vrot.lane.b32.xlu0 %v910, 1
  %v1228 = vpop.permute.xlu0 %1227
  %v1229 = vlaneseq
  %v1230 = vshrl.u32 %v1229, 7
  %v1231 = vsub.s32 2, %v1230
  %v1232 = vrot.slane %v36, %v1231
  %v1233 = vmul.f32 %v1224, %v1232
  %v1234 = vmul.f32 %v1226, %v1232
  %v1235 = vadd.f32 %v1221, %v1233
  %v1236 = vadd.f32 %v1222, %v1234
  %v1237 = vlaneseq
  %v1238 = vshrl.u32 %v1237, 7
  %v1239 = vsub.s32 3, %v1238
  %v1240 = vrot.slane %v36, %v1239
  %v1241 = vmul.f32 %v1224, %v1240
  %v1242 = vmul.f32 %v1226, %v1240
  %v1243 = vmul.f32 %v1228, %v1240
  %v1247 = vrot.slane %v1241, 1
  %v1248 = vrot.slane %v1242, 1
  %v1249 = vsel %vm69, %v1247, %v1248
  %v1250 = vrot.slane %v1243, 1
  %v1251 = vsel %vm69, %v1248, %v1250
  %v1254 = vadd.f32 %v1235, %v1249
  %v1255 = vadd.f32 %v1236, %v1251
  %v1256 = vlaneseq
  %v1257 = vshrl.u32 %v1256, 7
  %v1258 = vsub.s32 4, %v1257
  %v1259 = vrot.slane %v36, %v1258
  %v1260 = vmul.f32 %v1224, %v1259
  %v1261 = vmul.f32 %v1226, %v1259
  %v1262 = vmul.f32 %v1228, %v1259
  %v1266 = vrot.slane %v1260, 2
  %v1267 = vrot.slane %v1261, 2
  %v1268 = vsel %vm89, %v1266, %v1267
  %v1269 = vrot.slane %v1262, 2
  %v1270 = vsel %vm89, %v1267, %v1269
  %v1273 = vadd.f32 %v1254, %v1268
  %v1274 = vadd.f32 %v1255, %v1270
  %v1275 = vlaneseq
  %v1276 = vshrl.u32 %v1275, 7
  %v1277 = vsub.s32 5, %v1276
  %v1278 = vrot.slane %v36, %v1277
  %v1279 = vmul.f32 %v908, %v1278
  %v1280 = vmul.f32 %v909, %v1278
  %v1281 = vadd.f32 %v1273, %v1279
  %v1282 = vadd.f32 %v1274, %v1280
  %v1283 = vlaneseq
  %v1284 = vshrl.u32 %v1283, 7
  %v1285 = vsub.s32 6, %v1284
  %v1286 = vrot.slane %v36, %v1285
  %v1287 = vmul.f32 %v908, %v1286
  %v1288 = vmul.f32 %v909, %v1286
  %v1289 = vmul.f32 %v910, %v1286
  %v1293 = vrot.slane %v1287, 1
  %v1294 = vrot.slane %v1288, 1
  %v1295 = vsel %vm69, %v1293, %v1294
  %v1296 = vrot.slane %v1289, 1
  %v1297 = vsel %vm69, %v1294, %v1296
  %v1300 = vadd.f32 %v1281, %v1295
  %v1301 = vadd.f32 %v1282, %v1297
  %v1302 = vlaneseq
  %v1303 = vshrl.u32 %v1302, 7
  %v1304 = vsub.s32 7, %v1303
  %v1305 = vrot.slane %v36, %v1304
  %v1306 = vmul.f32 %v908, %v1305
  %v1307 = vmul.f32 %v909, %v1305
  %v1308 = vmul.f32 %v910, %v1305
  %v1312 = vrot.slane %v1306, 2
  %v1313 = vrot.slane %v1307, 2
  %v1314 = vsel %vm89, %v1312, %v1313
  %v1315 = vrot.slane %v1308, 2
  %v1316 = vsel %vm89, %v1313, %v1315
  %v1319 = vadd.f32 %v1300, %v1314
  %v1320 = vadd.f32 %v1301, %v1316
  %1321 = vrot.lane.b32.xlu0 %v908, 127
  %v1322 = vpop.permute.xlu0 %1321
  %1323 = vrot.lane.b32.xlu0 %v909, 127
  %v1324 = vpop.permute.xlu0 %1323
  %1325 = vrot.lane.b32.xlu0 %v910, 127
  %v1326 = vpop.permute.xlu0 %1325
  %v1327 = vlaneseq
  %v1328 = vshrl.u32 %v1327, 7
  %v1329 = vsub.s32 0, %v1328
  %v1330 = vrot.slane %v37, %v1329
  %v1331 = vmul.f32 %v1322, %v1330
  %v1332 = vmul.f32 %v1324, %v1330
  %v1333 = vadd.f32 %v1319, %v1331
  %v1334 = vadd.f32 %v1320, %v1332
  %v1335 = vlaneseq
  %v1336 = vshrl.u32 %v1335, 7
  %v1337 = vsub.s32 1, %v1336
  %v1338 = vrot.slane %v37, %v1337
  %v1339 = vmul.f32 %v1322, %v1338
  %v1340 = vmul.f32 %v1324, %v1338
  %v1341 = vmul.f32 %v1326, %v1338
  %v1345 = vrot.slane %v1339, 1
  %v1346 = vrot.slane %v1340, 1
  %v1347 = vsel %vm69, %v1345, %v1346
  %v1348 = vrot.slane %v1341, 1
  %v1349 = vsel %vm69, %v1346, %v1348
  %v1352 = vadd.f32 %v1333, %v1347
  %v1353 = vadd.f32 %v1334, %v1349
  %v1354 = vlaneseq
  %v1355 = vshrl.u32 %v1354, 7
  %v1356 = vsub.s32 2, %v1355
  %v1357 = vrot.slane %v37, %v1356
  %v1358 = vmul.f32 %v1322, %v1357
  %v1359 = vmul.f32 %v1324, %v1357
  %v1360 = vmul.f32 %v1326, %v1357
  %v1364 = vrot.slane %v1358, 2
  %v1365 = vrot.slane %v1359, 2
  %v1366 = vsel %vm89, %v1364, %v1365
  %v1367 = vrot.slane %v1360, 2
  %v1368 = vsel %vm89, %v1365, %v1367
  %v1371 = vadd.f32 %v1352, %v1366
  %v1372 = vadd.f32 %v1353, %v1368
  %1373 = vrot.lane.b32.xlu0 %v908, 126
  %v1374 = vpop.permute.xlu0 %1373
  %1375 = vrot.lane.b32.xlu0 %v909, 126
  %v1376 = vpop.permute.xlu0 %1375
  %1377 = vrot.lane.b32.xlu0 %v910, 126
  %v1378 = vpop.permute.xlu0 %1377
  %v1379 = vlaneseq
  %v1380 = vshrl.u32 %v1379, 7
  %v1381 = vsub.s32 3, %v1380
  %v1382 = vrot.slane %v37, %v1381
  %v1383 = vmul.f32 %v1374, %v1382
  %v1384 = vmul.f32 %v1376, %v1382
  %v1385 = vadd.f32 %v1371, %v1383
  %v1386 = vadd.f32 %v1372, %v1384
  %v1387 = vlaneseq
  %v1388 = vshrl.u32 %v1387, 7
  %v1389 = vsub.s32 4, %v1388
  %v1390 = vrot.slane %v37, %v1389
  %v1391 = vmul.f32 %v1374, %v1390
  %v1392 = vmul.f32 %v1376, %v1390
  %v1393 = vmul.f32 %v1378, %v1390
  %v1397 = vrot.slane %v1391, 1
  %v1398 = vrot.slane %v1392, 1
  %v1399 = vsel %vm69, %v1397, %v1398
  %v1400 = vrot.slane %v1393, 1
  %v1401 = vsel %vm69, %v1398, %v1400
  %v1404 = vadd.f32 %v1385, %v1399
  %v1405 = vadd.f32 %v1386, %v1401
  %v1406 = vlaneseq
  %v1407 = vshrl.u32 %v1406, 7
  %v1408 = vsub.s32 5, %v1407
  %v1409 = vrot.slane %v37, %v1408
  %v1410 = vmul.f32 %v1374, %v1409
  %v1411 = vmul.f32 %v1376, %v1409
  %v1412 = vmul.f32 %v1378, %v1409
  %v1416 = vrot.slane %v1410, 2
  %v1417 = vrot.slane %v1411, 2
  %v1418 = vsel %vm89, %v1416, %v1417
  %v1419 = vrot.slane %v1412, 2
  %v1420 = vsel %vm89, %v1417, %v1419
  %v1423 = vadd.f32 %v1404, %v1418
  %v1424 = vadd.f32 %v1405, %v1420
  %1425 = vrot.lane.b32.xlu0 %v908, 125
  %v1426 = vpop.permute.xlu0 %1425
  %1427 = vrot.lane.b32.xlu0 %v909, 125
  %v1428 = vpop.permute.xlu0 %1427
  %1429 = vrot.lane.b32.xlu0 %v910, 125
  %v1430 = vpop.permute.xlu0 %1429
  %v1431 = vlaneseq
  %v1432 = vshrl.u32 %v1431, 7
  %v1433 = vsub.s32 6, %v1432
  %v1434 = vrot.slane %v37, %v1433
  %v1435 = vmul.f32 %v1426, %v1434
  %v1436 = vmul.f32 %v1428, %v1434
  %v1437 = vadd.f32 %v1423, %v1435
  %v1438 = vadd.f32 %v1424, %v1436
  %v1439 = vlaneseq
  %v1440 = vshrl.u32 %v1439, 7
  %v1441 = vsub.s32 7, %v1440
  %v1442 = vrot.slane %v37, %v1441
  %v1443 = vmul.f32 %v1426, %v1442
  %v1444 = vmul.f32 %v1428, %v1442
  %v1445 = vmul.f32 %v1430, %v1442
  %v1449 = vrot.slane %v1443, 1
  %v1450 = vrot.slane %v1444, 1
  %v1451 = vsel %vm69, %v1449, %v1450
  %v1452 = vrot.slane %v1445, 1
  %v1453 = vsel %vm69, %v1450, %v1452
  %v1456 = vadd.f32 %v1437, %v1451
  %v1457 = vadd.f32 %v1438, %v1453
  %v1458 = vlaneseq
  %v1459 = vshrl.u32 %v1458, 7
  %v1460 = vsub.s32 0, %v1459
  %v1461 = vrot.slane %v38, %v1460
  %v1462 = vmul.f32 %v1426, %v1461
  %v1463 = vmul.f32 %v1428, %v1461
  %v1464 = vmul.f32 %v1430, %v1461
  %v1468 = vrot.slane %v1462, 2
  %v1469 = vrot.slane %v1463, 2
  %v1470 = vsel %vm89, %v1468, %v1469
  %v1471 = vrot.slane %v1464, 2
  %v1472 = vsel %vm89, %v1469, %v1471
  %v1475 = vadd.f32 %v1456, %v1470
  %v1476 = vadd.f32 %v1457, %v1472
  %1477 = vrot.lane.b32.xlu0 %v908, 124
  %v1478 = vpop.permute.xlu0 %1477
  %1479 = vrot.lane.b32.xlu0 %v909, 124
  %v1480 = vpop.permute.xlu0 %1479
  %1481 = vrot.lane.b32.xlu0 %v910, 124
  %v1482 = vpop.permute.xlu0 %1481
  %v1483 = vlaneseq
  %v1484 = vshrl.u32 %v1483, 7
  %v1485 = vsub.s32 1, %v1484
  %v1486 = vrot.slane %v38, %v1485
  %v1487 = vmul.f32 %v1478, %v1486
  %v1488 = vmul.f32 %v1480, %v1486
  %v1489 = vadd.f32 %v1475, %v1487
  %v1490 = vadd.f32 %v1476, %v1488
  %v1491 = vlaneseq
  %v1492 = vshrl.u32 %v1491, 7
  %v1493 = vsub.s32 2, %v1492
  %v1494 = vrot.slane %v38, %v1493
  %v1495 = vmul.f32 %v1478, %v1494
  %v1496 = vmul.f32 %v1480, %v1494
  %v1497 = vmul.f32 %v1482, %v1494
  %v1501 = vrot.slane %v1495, 1
  %v1502 = vrot.slane %v1496, 1
  %v1503 = vsel %vm69, %v1501, %v1502
  %v1504 = vrot.slane %v1497, 1
  %v1505 = vsel %vm69, %v1502, %v1504
  %v1508 = vadd.f32 %v1489, %v1503
  %v1509 = vadd.f32 %v1490, %v1505
  %v1510 = vlaneseq
  %v1511 = vshrl.u32 %v1510, 7
  %v1512 = vsub.s32 3, %v1511
  %v1513 = vrot.slane %v38, %v1512
  %v1514 = vmul.f32 %v1478, %v1513
  %v1515 = vmul.f32 %v1480, %v1513
  %v1516 = vmul.f32 %v1482, %v1513
  %v1520 = vrot.slane %v1514, 2
  %v1521 = vrot.slane %v1515, 2
  %v1522 = vsel %vm89, %v1520, %v1521
  %v1523 = vrot.slane %v1516, 2
  %v1524 = vsel %vm89, %v1521, %v1523
  %v1527 = vadd.f32 %v1508, %v1522
  %v1528 = vadd.f32 %v1509, %v1524
  %1529 = vrot.lane.b32.xlu0 %v908, 123
  %v1530 = vpop.permute.xlu0 %1529
  %1531 = vrot.lane.b32.xlu0 %v909, 123
  %v1532 = vpop.permute.xlu0 %1531
  %1533 = vrot.lane.b32.xlu0 %v910, 123
  %v1534 = vpop.permute.xlu0 %1533
  %v1535 = vlaneseq
  %v1536 = vshrl.u32 %v1535, 7
  %v1537 = vsub.s32 4, %v1536
  %v1538 = vrot.slane %v38, %v1537
  %v1539 = vmul.f32 %v1530, %v1538
  %v1540 = vmul.f32 %v1532, %v1538
  %v1541 = vadd.f32 %v1527, %v1539
  %v1542 = vadd.f32 %v1528, %v1540
  %v1543 = vlaneseq
  %v1544 = vshrl.u32 %v1543, 7
  %v1545 = vsub.s32 5, %v1544
  %v1546 = vrot.slane %v38, %v1545
  %v1547 = vmul.f32 %v1530, %v1546
  %v1548 = vmul.f32 %v1532, %v1546
  %v1549 = vmul.f32 %v1534, %v1546
  %v1553 = vrot.slane %v1547, 1
  %v1554 = vrot.slane %v1548, 1
  %v1555 = vsel %vm69, %v1553, %v1554
  %v1556 = vrot.slane %v1549, 1
  %v1557 = vsel %vm69, %v1554, %v1556
  %v1560 = vadd.f32 %v1541, %v1555
  %v1561 = vadd.f32 %v1542, %v1557
  %v1562 = vlaneseq
  %v1563 = vshrl.u32 %v1562, 7
  %v1564 = vsub.s32 6, %v1563
  %v1565 = vrot.slane %v38, %v1564
  %v1566 = vmul.f32 %v1530, %v1565
  %v1567 = vmul.f32 %v1532, %v1565
  %v1568 = vmul.f32 %v1534, %v1565
  %v1572 = vrot.slane %v1566, 2
  %v1573 = vrot.slane %v1567, 2
  %v1574 = vsel %vm89, %v1572, %v1573
  %v1575 = vrot.slane %v1568, 2
  %v1576 = vsel %vm89, %v1573, %v1575
  %v1579 = vadd.f32 %v1560, %v1574
  %v1580 = vadd.f32 %v1561, %v1576
  %1581 = vrot.lane.b32.xlu0 %v908, 122
  %v1582 = vpop.permute.xlu0 %1581
  %1583 = vrot.lane.b32.xlu0 %v909, 122
  %v1584 = vpop.permute.xlu0 %1583
  %1585 = vrot.lane.b32.xlu0 %v910, 122
  %v1586 = vpop.permute.xlu0 %1585
  %v1587 = vlaneseq
  %v1588 = vshrl.u32 %v1587, 7
  %v1589 = vsub.s32 7, %v1588
  %v1590 = vrot.slane %v38, %v1589
  %v1591 = vmul.f32 %v1582, %v1590
  %v1592 = vmul.f32 %v1584, %v1590
  %v1593 = vadd.f32 %v1579, %v1591
  %v1594 = vadd.f32 %v1580, %v1592
  %v1595 = vlaneseq
  %v1596 = vshrl.u32 %v1595, 7
  %v1597 = vsub.s32 0, %v1596
  %v1598 = vrot.slane %v39, %v1597
  %v1599 = vmul.f32 %v1582, %v1598
  %v1600 = vmul.f32 %v1584, %v1598
  %v1601 = vmul.f32 %v1586, %v1598
  %v1605 = vrot.slane %v1599, 1
  %v1606 = vrot.slane %v1600, 1
  %v1607 = vsel %vm69, %v1605, %v1606
  %v1608 = vrot.slane %v1601, 1
  %v1609 = vsel %vm69, %v1606, %v1608
  %v1612 = vadd.f32 %v1593, %v1607
  %v1613 = vadd.f32 %v1594, %v1609
  %v1614 = vlaneseq
  %v1615 = vshrl.u32 %v1614, 7
  %v1616 = vsub.s32 1, %v1615
  %v1617 = vrot.slane %v39, %v1616
  %v1618 = vmul.f32 %v1582, %v1617
  %v1619 = vmul.f32 %v1584, %v1617
  %v1620 = vmul.f32 %v1586, %v1617
  %v1624 = vrot.slane %v1618, 2
  %v1625 = vrot.slane %v1619, 2
  %v1626 = vsel %vm89, %v1624, %v1625
  %v1627 = vrot.slane %v1620, 2
  %v1628 = vsel %vm89, %v1625, %v1627
  %v1631 = vadd.f32 %v1612, %v1626
  %v1632 = vadd.f32 %v1613, %v1628
  %1633 = vrot.lane.b32.xlu0 %v908, 121
  %v1634 = vpop.permute.xlu0 %1633
  %1635 = vrot.lane.b32.xlu0 %v909, 121
  %v1636 = vpop.permute.xlu0 %1635
  %1637 = vrot.lane.b32.xlu0 %v910, 121
  %v1638 = vpop.permute.xlu0 %1637
  %v1639 = vlaneseq
  %v1640 = vshrl.u32 %v1639, 7
  %v1641 = vsub.s32 2, %v1640
  %v1642 = vrot.slane %v39, %v1641
  %v1643 = vmul.f32 %v1634, %v1642
  %v1644 = vmul.f32 %v1636, %v1642
  %v1645 = vadd.f32 %v1631, %v1643
  %v1646 = vadd.f32 %v1632, %v1644
  %v1647 = vlaneseq
  %v1648 = vshrl.u32 %v1647, 7
  %v1649 = vsub.s32 3, %v1648
  %v1650 = vrot.slane %v39, %v1649
  %v1651 = vmul.f32 %v1634, %v1650
  %v1652 = vmul.f32 %v1636, %v1650
  %v1653 = vmul.f32 %v1638, %v1650
  %v1657 = vrot.slane %v1651, 1
  %v1658 = vrot.slane %v1652, 1
  %v1659 = vsel %vm69, %v1657, %v1658
  %v1660 = vrot.slane %v1653, 1
  %v1661 = vsel %vm69, %v1658, %v1660
  %v1664 = vadd.f32 %v1645, %v1659
  %v1665 = vadd.f32 %v1646, %v1661
  %v1666 = vlaneseq
  %v1667 = vshrl.u32 %v1666, 7
  %v1668 = vsub.s32 4, %v1667
  %v1669 = vrot.slane %v39, %v1668
  %v1670 = vmul.f32 %v1634, %v1669
  %v1671 = vmul.f32 %v1636, %v1669
  %v1672 = vmul.f32 %v1638, %v1669
  %v1676 = vrot.slane %v1670, 2
  %v1677 = vrot.slane %v1671, 2
  %v1678 = vsel %vm89, %v1676, %v1677
  %v1679 = vrot.slane %v1672, 2
  %v1680 = vsel %vm89, %v1677, %v1679
  %v1683 = vadd.f32 %v1664, %v1678
  %v1684 = vadd.f32 %v1665, %v1680
  %v1685 = vlaneseq
  %v1686 = vshrl.u32 %v1685, 7
  %v1687 = vsub.s32 0, %v1686
  %v1688 = vrot.slane %v24, %v1687
  %v1689 = vadd.f32 %v1683, %v1688
  %v1690 = vadd.f32 %v1684, %v1688
  %v1691 = vadd.f32 %v1689, %v1690
  %v1692 = vrot.slane %v1691, 4
  %v1693 = vadd.f32 %v1691, %v1692
  %v1694 = vrot.slane %v1693, 2
  %v1695 = vadd.f32 %v1693, %v1694
  %v1696 = vrot.slane %v1695, 1
  %v1697 = vadd.f32 %v1695, %v1696
  %1698 = vrot.lane.b32.xlu0 %v1697, 4
  %v1699 = vpop.permute.xlu0 %1698
  %v1700 = vadd.f32 %v1697, %v1699
  %1701 = vrot.lane.b32.xlu0 %v1700, 8
  %v1702 = vpop.permute.xlu0 %1701
  %v1703 = vadd.f32 %v1700, %v1702
  %1704 = vrot.lane.b32.xlu0 %v1703, 16
  %v1705 = vpop.permute.xlu0 %1704
  %v1706 = vadd.f32 %v1703, %v1705
  %1707 = vrot.lane.b32.xlu0 %v1706, 32
  %v1708 = vpop.permute.xlu0 %1707
  %v1709 = vadd.f32 %v1706, %v1708
  %1710 = vrot.lane.b32.xlu0 %v1709, 64
  %v1711 = vpop.permute.xlu0 %1710
  %v1712 = vadd.f32 %v1709, %v1711
  %v1713 = vmul.f32 %v1689, %v1689
  %v1714 = vmul.f32 %v1690, %v1690
  %v1715 = vadd.f32 %v1713, %v1714
  %v1716 = vrot.slane %v1715, 4
  %v1717 = vadd.f32 %v1715, %v1716
  %v1718 = vrot.slane %v1717, 2
  %v1719 = vadd.f32 %v1717, %v1718
  %v1720 = vrot.slane %v1719, 1
  %v1721 = vadd.f32 %v1719, %v1720
  %1722 = vrot.lane.b32.xlu0 %v1721, 4
  %v1723 = vpop.permute.xlu0 %1722
  %v1724 = vadd.f32 %v1721, %v1723
  %1725 = vrot.lane.b32.xlu0 %v1724, 8
  %v1726 = vpop.permute.xlu0 %1725
  %v1727 = vadd.f32 %v1724, %v1726
  %1728 = vrot.lane.b32.xlu0 %v1727, 16
  %v1729 = vpop.permute.xlu0 %1728
  %v1730 = vadd.f32 %v1727, %v1729
  %1731 = vrot.lane.b32.xlu0 %v1730, 32
  %v1732 = vpop.permute.xlu0 %1731
  %v1733 = vadd.f32 %v1730, %v1732
  %1734 = vrot.lane.b32.xlu0 %v1733, 64
  %v1735 = vpop.permute.xlu0 %1734
  %v1736 = vadd.f32 %v1733, %v1735
  %v1737 = vmul.f32 %v1712, 0.001953125
  %v1738 = vmul.f32 %v1736, 0.001953125
  %v1739 = vmul.f32 %v1737, %v1737
  %v1740 = vsub.f32 %v1738, %v1739
  %v1741 = vadd.f32 %v1740, 1e-05
  %v1742 = vrsqrt.pop %v1741
  %v1743 = vmul.f32 %v25, %v1742
  %v1744 = vmul.f32 %v1737, %v1743
  %v1745 = vsub.f32 %v26, %v1744
  %v1746 = vlaneseq
  %v1747 = vshrl.u32 %v1746, 7
  %v1748 = vsub.s32 0, %v1747
  %v1749 = vrot.slane %v1743, %v1748
  %v1750 = vmul.f32 %v1689, %v1749
  %v1751 = vmul.f32 %v1690, %v1749
  %v1752 = vlaneseq
  %v1753 = vshrl.u32 %v1752, 7
  %v1754 = vsub.s32 0, %v1753
  %v1755 = vrot.slane %v1745, %v1754
  %v1756 = vadd.f32 %v1750, %v1755
  %v1757 = vadd.f32 %v1751, %v1755
  %v1758 = vadd.f32 %v1756, %v17
  %v1759 = vadd.f32 %v1757, %v18
  %1760 = vst [vmem:[%s4] sm:$0xff] %v1758
  %1761 = vst [vmem:[%s4 + $0x8] sm:$0xff] %v1759
  // Predicated region
  $region18: #{resblock_forward.1} parent=0 // pred_check
    _
  $region19: #{resblock_forward.1} parent=0 // pred_check_branch
    %1763 = sbr.rel (0) target = $region21
  $region20: #{resblock_forward.1} parent=0 // pred_region
    _
  $region21: #{resblock_forward.1} parent=0 // pred_fallthru
    _
  // Predicated region
  $region22: #{resblock_forward.1} parent=0 // pred_check
    _
  $region23: #{resblock_forward.1} parent=0 // pred_check_branch
    %1765 = sbr.rel (0) target = $region25
  $region24: #{resblock_forward.1} parent=0 // pred_region
    _
  $region25: #{resblock_forward.1} parent=0 // pred_fallthru
    _

</llo_original>
